<compile_context>
chip_gen: v5e
topology: v5e:2x2
jax: 0.10.0
libtpu: 0.0.40
codegen_flags: <defaults>
</compile_context>

<pallas_src>
import math

import jax
import jax.numpy as jnp
from jax.experimental import pallas as pl
from jax.experimental.pallas import tpu as pltpu


def _make_kernel(heads_num, per_head_size):
    d = per_head_size

    def kernel(q_ref, k_ref, v_ref, mask_ref,
               wq_ref, bq_ref, wk_ref, bk_ref, wv_ref, bv_ref,
               wo_ref, bo_ref, out_ref, k_scr, v_scr, ctx_scr):
        # ---- K/V projections: one full-width (S,H)@(H,H) matmul each, done
        # once per batch element (first query tile), stored lane-dense in
        # persistent VMEM scratch and reused by every query tile. ----
        @pl.when(pl.program_id(1) == 0)
        def _project_kv():
            xk = k_ref[0]                                     # (S, H) bf16
            xv = v_ref[0]                                     # (S, H) bf16
            kf = jnp.dot(xk, wk_ref[...],
                         preferred_element_type=jnp.float32) + bk_ref[...]
            vf = jnp.dot(xv, wv_ref[...],
                         preferred_element_type=jnp.float32) + bv_ref[...]
            k_scr[...] = kf.astype(jnp.bfloat16)              # (S, H)
            v_scr[...] = vf.astype(jnp.bfloat16)              # (S, H)

        xq = q_ref[0]                                         # (tq, H) bf16
        mask = mask_ref[0, 0].astype(jnp.float32)             # (tq, S) additive

        # Full-width Q projection; 1/sqrt(d) already folded into wq/bq.
        q_full = (jnp.dot(xq, wq_ref[...],
                          preferred_element_type=jnp.float32)
                  + bq_ref[...]).astype(jnp.bfloat16)         # (tq, H)

        # TODO(synk): for very large head counts, switch this static loop to a
        # lax.fori_loop over a (heads, ., d)-laid-out scratch to bound live
        # ranges further; intermediates here are already per-iteration local
        # (each head writes straight into ctx_scr).
        for h in range(heads_num):
            lo = h * d
            qh = q_full[:, lo:lo + d]                         # (tq, d) bf16
            kh = k_scr[:, lo:lo + d]                          # (S, d)  bf16
            vh = v_scr[:, lo:lo + d]                          # (S, d)  bf16

            # scores = qh @ kh^T expressed as a d-contraction (no transpose).
            scores = jax.lax.dot_general(
                qh, kh, dimension_numbers=(((1,), (1,)), ((), ())),
                preferred_element_type=jnp.float32)           # (tq, S) f32
            scores = scores + mask

            # Numerically stable softmax in f32; reciprocal on the EUP.
            scores = scores - jnp.max(scores, axis=-1, keepdims=True)
            p = jnp.exp(scores)
            inv = pl.reciprocal(jnp.sum(p, axis=-1, keepdims=True), approx=True)
            probs = (p * inv).astype(jnp.bfloat16)
            # TODO(synk): attention-prob dropout is identity in eval mode; a
            # training version would use pltpu.prng_seed / prng_random_bits.

            ctx_h = jnp.dot(probs, vh,
                            preferred_element_type=jnp.float32)  # (tq, d) f32
            ctx_scr[:, lo:lo + d] = ctx_h.astype(jnp.bfloat16)

        # One full-width output projection over the concatenated heads.
        out = jnp.dot(ctx_scr[...], wo_ref[...],
                      preferred_element_type=jnp.float32) + bo_ref[...]
        out_ref[0] = out.astype(out_ref.dtype)

    return kernel


def _pick_block_q(S):
    """Largest q-tile that divides S while keeping the f32 (block_q, S)
    score/prob intermediates within a small VMEM budget."""
    budget = 2 * 1024 * 1024  # bytes for one f32 (block_q, S) buffer
    cands = (512, 256, 128, 64, 32, 16, 8)
    for cand in cands:
        if S % cand == 0 and cand * S * 4 <= budget:
            return cand
    for cand in cands:
        if S % cand == 0:
            return cand
    return S


def multi_headed_attention(key, value, query, mask, params, heads_num,
                           *, block_q=None):
    """Pallas-backed forward pass matching MultiHeadedAttention.forward."""
    B, S, H = key.shape
    d = H // heads_num
    out_dtype = query.dtype

    if block_q is None:
        block_q = _pick_block_q(S)
    assert S % block_q == 0
    n_q = S // block_q

    scale = 1.0 / math.sqrt(float(d))

    # --- Host-side prep (free): pre-transpose weights, fold 1/sqrt(d) into
    # Wq/bq, cast weights + activations + mask to bf16. ---
    wq_t = (params["wq"].T * scale).astype(jnp.bfloat16)   # (H, H)
    wk_t = params["wk"].T.astype(jnp.bfloat16)
    wv_t = params["wv"].T.astype(jnp.bfloat16)
    wo_t = params["wo"].T.astype(jnp.bfloat16)
    bq = (params["bq"] * scale).reshape(1, H).astype(jnp.float32)
    bk = params["bk"].reshape(1, H).astype(jnp.float32)
    bv = params["bv"].reshape(1, H).astype(jnp.float32)
    bo = params["bo"].reshape(1, H).astype(jnp.float32)

    query_bf = query.astype(jnp.bfloat16)
    key_bf = key.astype(jnp.bfloat16)
    value_bf = value.astype(jnp.bfloat16)
    # TODO(synk): for pure padding/causal masks, stream int8 bits or lengths
    # and expand in-kernel instead of this dense O(S^2) additive mask.
    mask_bf = mask.astype(jnp.bfloat16)

    # --- VMEM accounting (includes f32 softmax intermediates), clamped to the
    # physical VMEM of the current TPU generation (v7x = 64 MiB per core). ---
    BF, F32 = 2, 4
    est = (
        2 * block_q * H * BF                 # query block (double buffered)
        + 2 * 2 * S * H * BF                 # key + value blocks
        + 2 * block_q * S * BF               # mask block
        + 2 * block_q * H * out_dtype.itemsize   # output block
        + 4 * H * H * BF + 4 * H * F32       # weights/biases (single buffered)
        + 2 * S * H * BF                     # projected K/V scratch
        + block_q * H * BF                   # ctx scratch
        + block_q * H * F32                  # q_full intermediate
        + 3 * block_q * S * F32              # scores / exp / sum intermediates
    )
    try:
        phys_vmem = int(pltpu.get_tpu_info().vmem_capacity_bytes)
    except Exception:
        phys_vmem = 64 * 1024 * 1024         # conservative (v7x per-core)
    cap = max(int(phys_vmem * 0.75), 32 * 1024 * 1024)
    vmem_limit = int(min(max(int(est * 1.25), 32 * 1024 * 1024), cap))

    q_spec = pl.BlockSpec((1, block_q, H), lambda b, qi: (b, qi, 0))
    kv_spec = pl.BlockSpec((1, S, H), lambda b, qi: (b, 0, 0))
    mask_spec = pl.BlockSpec((1, 1, block_q, S), lambda b, qi: (b, 0, qi, 0))
    # Constant-index weights/biases: single-buffered (saves VMEM, no refetch).
    w_spec = pl.BlockSpec((H, H), lambda b, qi: (0, 0),
                          pipeline_mode=pl.Buffered(1))
    b_spec = pl.BlockSpec((1, H), lambda b, qi: (0, 0),
                          pipeline_mode=pl.Buffered(1))
    out_spec = pl.BlockSpec((1, block_q, H), lambda b, qi: (b, qi, 0))

    kernel = _make_kernel(heads_num, d)

    return pl.pallas_call(
        kernel,
        out_shape=jax.ShapeDtypeStruct((B, S, H), out_dtype),
        grid_spec=pltpu.PrefetchScalarGridSpec(
            num_scalar_prefetch=0,
            grid=(B, n_q),
            in_specs=[
                q_spec,               # query (linear_layers[0])
                kv_spec,              # key   (linear_layers[1])
                kv_spec,              # value (linear_layers[2])
                mask_spec,            # additive mask
                w_spec, b_spec,       # Wq (scaled), bq (scaled)
                w_spec, b_spec,       # Wk, bk
                w_spec, b_spec,       # Wv, bv
                w_spec, b_spec,       # Wo, bo
            ],
            out_specs=out_spec,
            scratch_shapes=[
                pltpu.VMEM((S, H), jnp.bfloat16),         # projected K (lane-dense)
                pltpu.VMEM((S, H), jnp.bfloat16),         # projected V (lane-dense)
                pltpu.VMEM((block_q, H), jnp.bfloat16),   # concat-head context
            ]),
        compiler_params=pltpu.CompilerParams(
            # Batch axis parallel (megacore); q-tile axis "arbitrary" because
            # the K/V scratch carries state across query tiles.
            dimension_semantics=("parallel", "arbitrary"),
            vmem_limit_bytes=vmem_limit),
    )(query_bf, key_bf, value_bf, mask_bf,
      wq_t, bq, wk_t, bk, wv_t, bv, wo_t, bo)


def reference_mha(key, value, query, mask, params, heads_num):
    """Pure-JAX f32 reference matching the PyTorch forward pass."""
    B, S, H = key.shape
    d = H // heads_num

    def linear(x, w, b):
        return x @ w.T + b

    def shape(x):
        return x.reshape(B, S, heads_num, d).transpose(0, 2, 1, 3)

    q = shape(linear(query, params["wq"], params["bq"]))
    k = shape(linear(key, params["wk"], params["bk"]))
    v = shape(linear(value, params["wv"], params["bv"]))

    scores = jnp.einsum("bhqd,bhkd->bhqk", q, k) / math.sqrt(float(d))
    scores = scores + mask
    probs = jax.nn.softmax(scores, axis=-1)
    ctx = jnp.einsum("bhqk,bhkd->bhqd", probs, v)
    ctx = ctx.transpose(0, 2, 1, 3).reshape(B, S, H)
    return linear(ctx, params["wo"], params["bo"])


def _make_inputs(B, S, H, heads_num, seed=0):
    root = jax.random.PRNGKey(seed)
    ks = jax.random.split(root, 12)
    bound = 1.0 / math.sqrt(H)
    params = {
        "wq": jax.random.uniform(ks[0], (H, H), jnp.float32, -bound, bound),
        "bq": jax.random.uniform(ks[1], (H,), jnp.float32, -bound, bound),
        "wk": jax.random.uniform(ks[2], (H, H), jnp.float32, -bound, bound),
        "bk": jax.random.uniform(ks[3], (H,), jnp.float32, -bound, bound),
        "wv": jax.random.uniform(ks[4], (H, H), jnp.float32, -bound, bound),
        "bv": jax.random.uniform(ks[5], (H,), jnp.float32, -bound, bound),
        "wo": jax.random.uniform(ks[6], (H, H), jnp.float32, -bound, bound),
        "bo": jax.random.uniform(ks[7], (H,), jnp.float32, -bound, bound),
    }
    key = jax.random.normal(ks[8], (B, S, H), jnp.float32)
    value = jax.random.normal(ks[9], (B, S, H), jnp.float32)
    query = jax.random.normal(ks[10], (B, S, H), jnp.float32)
    mask_bits = jax.random.bernoulli(ks[11], 0.9, (B, 1, S, S))
    mask = jnp.where(mask_bits, 0.0, -10000.0).astype(jnp.float32)
    return key, value, query, mask, params


if __name__ == "__main__":
    heads_num = 4

    # Case 1: basic small shape (single query tile).
    B, S, H = 2, 8, 32
    key, value, query, mask, params = _make_inputs(B, S, H, heads_num, seed=0)
    out = multi_headed_attention(key, value, query, mask, params, heads_num)
    out = jax.block_until_ready(out)
    ref = reference_mha(key, value, query, mask, params, heads_num)
    assert out.shape == (B, S, H)
    # bf16 matmul inputs + approx reciprocal -> loosened tolerance vs f32 ref.
    assert jnp.allclose(out, ref, atol=5e-2, rtol=5e-2), (
        float(jnp.max(jnp.abs(out - ref))))

    # Case 2: exercise the q-tiling + persistent K/V scratch path (n_q = 2).
    B2, S2, H2 = 2, 16, 32
    key2, value2, query2, mask2, params2 = _make_inputs(B2, S2, H2, heads_num,
                                                        seed=1)
    out2 = multi_headed_attention(key2, value2, query2, mask2, params2,
                                  heads_num, block_q=8)
    out2 = jax.block_until_ready(out2)
    ref2 = reference_mha(key2, value2, query2, mask2, params2, heads_num)
    assert out2.shape == (B2, S2, H2)
    assert jnp.allclose(out2, ref2, atol=5e-2, rtol=5e-2), (
        float(jnp.max(jnp.abs(out2 - ref2))))

    print("KERNEL_OK")
</pallas_src>

<mosaic_0001>
module attributes {stable_mosaic.version = 11 : i64} {
  func.func @kernel(%arg0: i32, %arg1: i32, %arg2: memref<1x8x32xbf16, #tpu.memory_space<vmem>>, %arg3: memref<1x8x32xbf16, #tpu.memory_space<vmem>>, %arg4: memref<1x8x32xbf16, #tpu.memory_space<vmem>>, %arg5: memref<1x1x8x8xbf16, #tpu.memory_space<vmem>>, %arg6: memref<32x32xbf16, #tpu.memory_space<vmem>>, %arg7: memref<1x32xf32, #tpu.memory_space<vmem>>, %arg8: memref<32x32xbf16, #tpu.memory_space<vmem>>, %arg9: memref<1x32xf32, #tpu.memory_space<vmem>>, %arg10: memref<32x32xbf16, #tpu.memory_space<vmem>>, %arg11: memref<1x32xf32, #tpu.memory_space<vmem>>, %arg12: memref<32x32xbf16, #tpu.memory_space<vmem>>, %arg13: memref<1x32xf32, #tpu.memory_space<vmem>>, %arg14: memref<1x8x32xf32, #tpu.memory_space<vmem>>, %arg15: memref<8x32xbf16, #tpu.memory_space<vmem>>, %arg16: memref<8x32xbf16, #tpu.memory_space<vmem>>, %arg17: memref<8x32xbf16, #tpu.memory_space<vmem>>) attributes {dimension_semantics = [#tpu.dimension_semantics<parallel>, #tpu.dimension_semantics<arbitrary>], iteration_bounds = array<i64: 2, 1>, scalar_prefetch = 0 : i64, scratch_operands = 3 : i64, tpu.core_type = #tpu.core_type<tc>, window_params = [{transform_indices = @transform_0, window_bounds = array<i64: 1, 8, 32>}, {transform_indices = @transform_1, window_bounds = array<i64: 1, 8, 32>}, {transform_indices = @transform_2, window_bounds = array<i64: 1, 8, 32>}, {transform_indices = @transform_3, window_bounds = array<i64: 1, 1, 8, 8>}, {pipeline_mode = #tpu.pipeline_mode<synchronous>, transform_indices = @transform_4, window_bounds = array<i64: 32, 32>}, {pipeline_mode = #tpu.pipeline_mode<synchronous>, transform_indices = @transform_5, window_bounds = array<i64: 1, 32>}, {pipeline_mode = #tpu.pipeline_mode<synchronous>, transform_indices = @transform_6, window_bounds = array<i64: 32, 32>}, {pipeline_mode = #tpu.pipeline_mode<synchronous>, transform_indices = @transform_7, window_bounds = array<i64: 1, 32>}, {pipeline_mode = #tpu.pipeline_mode<synchronous>, transform_indices = @transform_8, window_bounds = array<i64: 32, 32>}, {pipeline_mode = #tpu.pipeline_mode<synchronous>, transform_indices = @transform_9, window_bounds = array<i64: 1, 32>}, {pipeline_mode = #tpu.pipeline_mode<synchronous>, transform_indices = @transform_10, window_bounds = array<i64: 32, 32>}, {pipeline_mode = #tpu.pipeline_mode<synchronous>, transform_indices = @transform_11, window_bounds = array<i64: 1, 32>}, {transform_indices = @transform_12, window_bounds = array<i64: 1, 8, 32>}]} {
    %c0_i32 = arith.constant 0 : i32
    %0 = arith.cmpi eq, %arg1, %c0_i32 : i32
    %1 = arith.extui %0 : i1 to i32
    %c0_i32_0 = arith.constant 0 : i32
    %2 = arith.cmpi ne, %1, %c0_i32_0 : i32
    scf.if %2 {
      %c0_58 = arith.constant 0 : index
      %c0_59 = arith.constant 0 : index
      %c0_60 = arith.constant 0 : index
      %99 = vector.load %arg3[%c0_58, %c0_59, %c0_60] : memref<1x8x32xbf16, #tpu.memory_space<vmem>>, vector<1x8x32xbf16>
      %100 = vector.shape_cast %99 : vector<1x8x32xbf16> to vector<8x32xbf16>
      %c0_61 = arith.constant 0 : index
      %c0_62 = arith.constant 0 : index
      %c0_63 = arith.constant 0 : index
      %101 = vector.load %arg4[%c0_61, %c0_62, %c0_63] : memref<1x8x32xbf16, #tpu.memory_space<vmem>>, vector<1x8x32xbf16>
      %102 = vector.shape_cast %101 : vector<1x8x32xbf16> to vector<8x32xbf16>
      %c0_64 = arith.constant 0 : index
      %c0_65 = arith.constant 0 : index
      %103 = vector.load %arg8[%c0_64, %c0_65] : memref<32x32xbf16, #tpu.memory_space<vmem>>, vector<32x32xbf16>
      %cst_66 = arith.constant dense<0.000000e+00> : vector<8x32xf32>
      %104 = tpu.matmul %100, %103, %cst_66 {dimension_numbers = #tpu.dot_dimension_numbers<[1], [0], [0], [1], [0, 0, 1, 1], [], []>} : vector<8x32xbf16>, vector<32x32xbf16>, vector<8x32xf32> -> vector<8x32xf32>
      %c0_67 = arith.constant 0 : index
      %c0_68 = arith.constant 0 : index
      %105 = vector.load %arg9[%c0_67, %c0_68] : memref<1x32xf32, #tpu.memory_space<vmem>>, vector<1x32xf32>
      %106 = vector.broadcast %105 : vector<1x32xf32> to vector<8x32xf32>
      %107 = arith.addf %104, %106 : vector<8x32xf32>
      %c0_69 = arith.constant 0 : index
      %c0_70 = arith.constant 0 : index
      %108 = vector.load %arg10[%c0_69, %c0_70] : memref<32x32xbf16, #tpu.memory_space<vmem>>, vector<32x32xbf16>
      %cst_71 = arith.constant dense<0.000000e+00> : vector<8x32xf32>
      %109 = tpu.matmul %102, %108, %cst_71 {dimension_numbers = #tpu.dot_dimension_numbers<[1], [0], [0], [1], [0, 0, 1, 1], [], []>} : vector<8x32xbf16>, vector<32x32xbf16>, vector<8x32xf32> -> vector<8x32xf32>
      %c0_72 = arith.constant 0 : index
      %c0_73 = arith.constant 0 : index
      %110 = vector.load %arg11[%c0_72, %c0_73] : memref<1x32xf32, #tpu.memory_space<vmem>>, vector<1x32xf32>
      %111 = vector.broadcast %110 : vector<1x32xf32> to vector<8x32xf32>
      %112 = arith.addf %109, %111 : vector<8x32xf32>
      %113 = arith.truncf %107 : vector<8x32xf32> to vector<8x32xbf16>
      %c0_74 = arith.constant 0 : index
      %c0_75 = arith.constant 0 : index
      %114 = vector.load %arg15[%c0_74, %c0_75] : memref<8x32xbf16, #tpu.memory_space<vmem>>, vector<8x32xbf16>
      tpu.vector_store %arg15[%c0_74, %c0_75], %113 {strides = array<i32>} : memref<8x32xbf16, #tpu.memory_space<vmem>>, vector<8x32xbf16>,
      %115 = arith.truncf %112 : vector<8x32xf32> to vector<8x32xbf16>
      %c0_76 = arith.constant 0 : index
      %c0_77 = arith.constant 0 : index
      %116 = vector.load %arg16[%c0_76, %c0_77] : memref<8x32xbf16, #tpu.memory_space<vmem>>, vector<8x32xbf16>
      tpu.vector_store %arg16[%c0_76, %c0_77], %115 {strides = array<i32>} : memref<8x32xbf16, #tpu.memory_space<vmem>>, vector<8x32xbf16>,
    } else {
    }
    %c0 = arith.constant 0 : index
    %c0_1 = arith.constant 0 : index
    %c0_2 = arith.constant 0 : index
    %3 = vector.load %arg2[%c0, %c0_1, %c0_2] : memref<1x8x32xbf16, #tpu.memory_space<vmem>>, vector<1x8x32xbf16>
    %4 = vector.shape_cast %3 : vector<1x8x32xbf16> to vector<8x32xbf16>
    %c0_3 = arith.constant 0 : index
    %c0_4 = arith.constant 0 : index
    %c0_5 = arith.constant 0 : index
    %c0_6 = arith.constant 0 : index
    %5 = vector.load %arg5[%c0_3, %c0_4, %c0_5, %c0_6] : memref<1x1x8x8xbf16, #tpu.memory_space<vmem>>, vector<1x1x8x8xbf16>
    %6 = vector.shape_cast %5 : vector<1x1x8x8xbf16> to vector<8x8xbf16>
    %7 = arith.extf %6 : vector<8x8xbf16> to vector<8x8xf32>
    %c0_7 = arith.constant 0 : index
    %c0_8 = arith.constant 0 : index
    %8 = vector.load %arg6[%c0_7, %c0_8] : memref<32x32xbf16, #tpu.memory_space<vmem>>, vector<32x32xbf16>
    %cst = arith.constant dense<0.000000e+00> : vector<8x32xf32>
    %9 = tpu.matmul %4, %8, %cst {dimension_numbers = #tpu.dot_dimension_numbers<[1], [0], [0], [1], [0, 0, 1, 1], [], []>} : vector<8x32xbf16>, vector<32x32xbf16>, vector<8x32xf32> -> vector<8x32xf32>
    %c0_9 = arith.constant 0 : index
    %c0_10 = arith.constant 0 : index
    %10 = vector.load %arg7[%c0_9, %c0_10] : memref<1x32xf32, #tpu.memory_space<vmem>>, vector<1x32xf32>
    %11 = vector.broadcast %10 : vector<1x32xf32> to vector<8x32xf32>
    %12 = arith.addf %9, %11 : vector<8x32xf32>
    %13 = arith.truncf %12 : vector<8x32xf32> to vector<8x32xbf16>
    %14 = vector.extract_strided_slice %13 {offsets = [0, 0], sizes = [8, 8], strides = [1, 1]} : vector<8x32xbf16> to vector<8x8xbf16>
    %c0_11 = arith.constant 0 : index
    %c0_12 = arith.constant 0 : index
    %15 = vector.load %arg15[%c0_11, %c0_12] : memref<8x32xbf16, #tpu.memory_space<vmem>>, vector<8x8xbf16>
    %c0_13 = arith.constant 0 : index
    %c0_14 = arith.constant 0 : index
    %16 = vector.load %arg16[%c0_13, %c0_14] : memref<8x32xbf16, #tpu.memory_space<vmem>>, vector<8x8xbf16>
    %cst_15 = arith.constant dense<0.000000e+00> : vector<8x8xf32>
    %17 = tpu.matmul %14, %15, %cst_15 {dimension_numbers = #tpu.dot_dimension_numbers<[1], [1], [0], [0], [0, 0, 1, 0], [], []>} : vector<8x8xbf16>, vector<8x8xbf16>, vector<8x8xf32> -> vector<8x8xf32>
    %18 = arith.addf %17, %7 : vector<8x8xf32>
    %cst_16 = arith.constant dense<0xFF800000> : vector<8xf32>
    %19 = vector.multi_reduction <maximumf>, %18, %cst_16 [1] : vector<8x8xf32> to vector<8xf32>
    %20 = vector.shape_cast %19 : vector<8xf32> to vector<8x1xf32>
    %21 = vector.broadcast %20 : vector<8x1xf32> to vector<8x8xf32>
    %22 = arith.subf %18, %21 : vector<8x8xf32>
    %23 = math.exp %22 : vector<8x8xf32>
    %cst_17 = arith.constant dense<0.000000e+00> : vector<8xf32>
    %24 = vector.multi_reduction <add>, %23, %cst_17 [1] : vector<8x8xf32> to vector<8xf32>
    %25 = vector.shape_cast %24 : vector<8xf32> to vector<8x1xf32>
    %26 = tpu.reciprocal %25 {approx = true} : vector<8x1xf32> -> vector<8x1xf32>
    %27 = vector.broadcast %26 : vector<8x1xf32> to vector<8x8xf32>
    %28 = arith.mulf %23, %27 : vector<8x8xf32>
    %29 = arith.truncf %28 : vector<8x8xf32> to vector<8x8xbf16>
    %cst_18 = arith.constant dense<0.000000e+00> : vector<8x8xf32>
    %30 = tpu.matmul %29, %16, %cst_18 {dimension_numbers = #tpu.dot_dimension_numbers<[1], [0], [0], [1], [0, 0, 1, 1], [], []>} : vector<8x8xbf16>, vector<8x8xbf16>, vector<8x8xf32> -> vector<8x8xf32>
    %31 = arith.truncf %30 : vector<8x8xf32> to vector<8x8xbf16>
    %c0_19 = arith.constant 0 : index
    %c0_20 = arith.constant 0 : index
    %32 = vector.load %arg17[%c0_19, %c0_20] : memref<8x32xbf16, #tpu.memory_space<vmem>>, vector<8x8xbf16>
    tpu.vector_store %arg17[%c0_19, %c0_20], %31 {strides = array<i32>} : memref<8x32xbf16, #tpu.memory_space<vmem>>, vector<8x8xbf16>,
    %33 = vector.extract_strided_slice %13 {offsets = [0, 8], sizes = [8, 8], strides = [1, 1]} : vector<8x32xbf16> to vector<8x8xbf16>
    %c0_21 = arith.constant 0 : index
    %c8 = arith.constant 8 : index
    %34 = vector.load %arg15[%c0_21, %c8] : memref<8x32xbf16, #tpu.memory_space<vmem>>, vector<8x8xbf16>
    %c0_22 = arith.constant 0 : index
    %c8_23 = arith.constant 8 : index
    %35 = vector.load %arg16[%c0_22, %c8_23] : memref<8x32xbf16, #tpu.memory_space<vmem>>, vector<8x8xbf16>
    %cst_24 = arith.constant dense<0.000000e+00> : vector<8x8xf32>
    %36 = tpu.matmul %33, %34, %cst_24 {dimension_numbers = #tpu.dot_dimension_numbers<[1], [1], [0], [0], [0, 0, 1, 0], [], []>} : vector<8x8xbf16>, vector<8x8xbf16>, vector<8x8xf32> -> vector<8x8xf32>
    %37 = arith.addf %36, %7 : vector<8x8xf32>
    %cst_25 = arith.constant dense<0xFF800000> : vector<8xf32>
    %38 = vector.multi_reduction <maximumf>, %37, %cst_25 [1] : vector<8x8xf32> to vector<8xf32>
    %39 = vector.shape_cast %38 : vector<8xf32> to vector<8x1xf32>
    %40 = vector.broadcast %39 : vector<8x1xf32> to vector<8x8xf32>
    %41 = arith.subf %37, %40 : vector<8x8xf32>
    %42 = math.exp %41 : vector<8x8xf32>
    %cst_26 = arith.constant dense<0.000000e+00> : vector<8xf32>
    %43 = vector.multi_reduction <add>, %42, %cst_26 [1] : vector<8x8xf32> to vector<8xf32>
    %44 = vector.shape_cast %43 : vector<8xf32> to vector<8x1xf32>
    %45 = tpu.reciprocal %44 {approx = true} : vector<8x1xf32> -> vector<8x1xf32>
    %46 = vector.broadcast %45 : vector<8x1xf32> to vector<8x8xf32>
    %47 = arith.mulf %42, %46 : vector<8x8xf32>
    %48 = arith.truncf %47 : vector<8x8xf32> to vector<8x8xbf16>
    %cst_27 = arith.constant dense<0.000000e+00> : vector<8x8xf32>
    %49 = tpu.matmul %48, %35, %cst_27 {dimension_numbers = #tpu.dot_dimension_numbers<[1], [0], [0], [1], [0, 0, 1, 1], [], []>} : vector<8x8xbf16>, vector<8x8xbf16>, vector<8x8xf32> -> vector<8x8xf32>
    %50 = arith.truncf %49 : vector<8x8xf32> to vector<8x8xbf16>
    %c0_28 = arith.constant 0 : index
    %c8_29 = arith.constant 8 : index
    %51 = vector.load %arg17[%c0_28, %c8_29] : memref<8x32xbf16, #tpu.memory_space<vmem>>, vector<8x8xbf16>
    tpu.vector_store %arg17[%c0_28, %c8_29], %50 {strides = array<i32>} : memref<8x32xbf16, #tpu.memory_space<vmem>>, vector<8x8xbf16>,
    %52 = vector.extract_strided_slice %13 {offsets = [0, 16], sizes = [8, 8], strides = [1, 1]} : vector<8x32xbf16> to vector<8x8xbf16>
    %c0_30 = arith.constant 0 : index
    %c16 = arith.constant 16 : index
    %53 = vector.load %arg15[%c0_30, %c16] : memref<8x32xbf16, #tpu.memory_space<vmem>>, vector<8x8xbf16>
    %c0_31 = arith.constant 0 : index
    %c16_32 = arith.constant 16 : index
    %54 = vector.load %arg16[%c0_31, %c16_32] : memref<8x32xbf16, #tpu.memory_space<vmem>>, vector<8x8xbf16>
    %cst_33 = arith.constant dense<0.000000e+00> : vector<8x8xf32>
    %55 = tpu.matmul %52, %53, %cst_33 {dimension_numbers = #tpu.dot_dimension_numbers<[1], [1], [0], [0], [0, 0, 1, 0], [], []>} : vector<8x8xbf16>, vector<8x8xbf16>, vector<8x8xf32> -> vector<8x8xf32>
    %56 = arith.addf %55, %7 : vector<8x8xf32>
    %cst_34 = arith.constant dense<0xFF800000> : vector<8xf32>
    %57 = vector.multi_reduction <maximumf>, %56, %cst_34 [1] : vector<8x8xf32> to vector<8xf32>
    %58 = vector.shape_cast %57 : vector<8xf32> to vector<8x1xf32>
    %59 = vector.broadcast %58 : vector<8x1xf32> to vector<8x8xf32>
    %60 = arith.subf %56, %59 : vector<8x8xf32>
    %61 = math.exp %60 : vector<8x8xf32>
    %cst_35 = arith.constant dense<0.000000e+00> : vector<8xf32>
    %62 = vector.multi_reduction <add>, %61, %cst_35 [1] : vector<8x8xf32> to vector<8xf32>
    %63 = vector.shape_cast %62 : vector<8xf32> to vector<8x1xf32>
    %64 = tpu.reciprocal %63 {approx = true} : vector<8x1xf32> -> vector<8x1xf32>
    %65 = vector.broadcast %64 : vector<8x1xf32> to vector<8x8xf32>
    %66 = arith.mulf %61, %65 : vector<8x8xf32>
    %67 = arith.truncf %66 : vector<8x8xf32> to vector<8x8xbf16>
    %cst_36 = arith.constant dense<0.000000e+00> : vector<8x8xf32>
    %68 = tpu.matmul %67, %54, %cst_36 {dimension_numbers = #tpu.dot_dimension_numbers<[1], [0], [0], [1], [0, 0, 1, 1], [], []>} : vector<8x8xbf16>, vector<8x8xbf16>, vector<8x8xf32> -> vector<8x8xf32>
    %69 = arith.truncf %68 : vector<8x8xf32> to vector<8x8xbf16>
    %c0_37 = arith.constant 0 : index
    %c16_38 = arith.constant 16 : index
    %70 = vector.load %arg17[%c0_37, %c16_38] : memref<8x32xbf16, #tpu.memory_space<vmem>>, vector<8x8xbf16>
    tpu.vector_store %arg17[%c0_37, %c16_38], %69 {strides = array<i32>} : memref<8x32xbf16, #tpu.memory_space<vmem>>, vector<8x8xbf16>,
    %71 = vector.extract_strided_slice %13 {offsets = [0, 24], sizes = [8, 8], strides = [1, 1]} : vector<8x32xbf16> to vector<8x8xbf16>
    %c0_39 = arith.constant 0 : index
    %c24 = arith.constant 24 : index
    %72 = vector.load %arg15[%c0_39, %c24] : memref<8x32xbf16, #tpu.memory_space<vmem>>, vector<8x8xbf16>
    %c0_40 = arith.constant 0 : index
    %c24_41 = arith.constant 24 : index
    %73 = vector.load %arg16[%c0_40, %c24_41] : memref<8x32xbf16, #tpu.memory_space<vmem>>, vector<8x8xbf16>
    %cst_42 = arith.constant dense<0.000000e+00> : vector<8x8xf32>
    %74 = tpu.matmul %71, %72, %cst_42 {dimension_numbers = #tpu.dot_dimension_numbers<[1], [1], [0], [0], [0, 0, 1, 0], [], []>} : vector<8x8xbf16>, vector<8x8xbf16>, vector<8x8xf32> -> vector<8x8xf32>
    %75 = arith.addf %74, %7 : vector<8x8xf32>
    %cst_43 = arith.constant dense<0xFF800000> : vector<8xf32>
    %76 = vector.multi_reduction <maximumf>, %75, %cst_43 [1] : vector<8x8xf32> to vector<8xf32>
    %77 = vector.shape_cast %76 : vector<8xf32> to vector<8x1xf32>
    %78 = vector.broadcast %77 : vector<8x1xf32> to vector<8x8xf32>
    %79 = arith.subf %75, %78 : vector<8x8xf32>
    %80 = math.exp %79 : vector<8x8xf32>
    %cst_44 = arith.constant dense<0.000000e+00> : vector<8xf32>
    %81 = vector.multi_reduction <add>, %80, %cst_44 [1] : vector<8x8xf32> to vector<8xf32>
    %82 = vector.shape_cast %81 : vector<8xf32> to vector<8x1xf32>
    %83 = tpu.reciprocal %82 {approx = true} : vector<8x1xf32> -> vector<8x1xf32>
    %84 = vector.broadcast %83 : vector<8x1xf32> to vector<8x8xf32>
    %85 = arith.mulf %80, %84 : vector<8x8xf32>
    %86 = arith.truncf %85 : vector<8x8xf32> to vector<8x8xbf16>
    %cst_45 = arith.constant dense<0.000000e+00> : vector<8x8xf32>
    %87 = tpu.matmul %86, %73, %cst_45 {dimension_numbers = #tpu.dot_dimension_numbers<[1], [0], [0], [1], [0, 0, 1, 1], [], []>} : vector<8x8xbf16>, vector<8x8xbf16>, vector<8x8xf32> -> vector<8x8xf32>
    %88 = arith.truncf %87 : vector<8x8xf32> to vector<8x8xbf16>
    %c0_46 = arith.constant 0 : index
    %c24_47 = arith.constant 24 : index
    %89 = vector.load %arg17[%c0_46, %c24_47] : memref<8x32xbf16, #tpu.memory_space<vmem>>, vector<8x8xbf16>
    tpu.vector_store %arg17[%c0_46, %c24_47], %88 {strides = array<i32>} : memref<8x32xbf16, #tpu.memory_space<vmem>>, vector<8x8xbf16>,
    %c0_48 = arith.constant 0 : index
    %c0_49 = arith.constant 0 : index
    %90 = vector.load %arg17[%c0_48, %c0_49] : memref<8x32xbf16, #tpu.memory_space<vmem>>, vector<8x32xbf16>
    %c0_50 = arith.constant 0 : index
    %c0_51 = arith.constant 0 : index
    %91 = vector.load %arg12[%c0_50, %c0_51] : memref<32x32xbf16, #tpu.memory_space<vmem>>, vector<32x32xbf16>
    %cst_52 = arith.constant dense<0.000000e+00> : vector<8x32xf32>
    %92 = tpu.matmul %90, %91, %cst_52 {dimension_numbers = #tpu.dot_dimension_numbers<[1], [0], [0], [1], [0, 0, 1, 1], [], []>} : vector<8x32xbf16>, vector<32x32xbf16>, vector<8x32xf32> -> vector<8x32xf32>
    %c0_53 = arith.constant 0 : index
    %c0_54 = arith.constant 0 : index
    %93 = vector.load %arg13[%c0_53, %c0_54] : memref<1x32xf32, #tpu.memory_space<vmem>>, vector<1x32xf32>
    %94 = vector.broadcast %93 : vector<1x32xf32> to vector<8x32xf32>
    %95 = arith.addf %92, %94 : vector<8x32xf32>
    %c0_55 = arith.constant 0 : index
    %c0_56 = arith.constant 0 : index
    %c0_57 = arith.constant 0 : index
    %96 = vector.load %arg14[%c0_55, %c0_56, %c0_57] : memref<1x8x32xf32, #tpu.memory_space<vmem>>, vector<1x8x32xf32>
    %97 = vector.shape_cast %96 : vector<1x8x32xf32> to vector<8x32xf32>
    %98 = vector.shape_cast %95 : vector<8x32xf32> to vector<1x8x32xf32>
    tpu.vector_store %arg14[%c0_55, %c0_56, %c0_57], %98 {strides = array<i32>} : memref<1x8x32xf32, #tpu.memory_space<vmem>>, vector<1x8x32xf32>,
    return
  }
  func.func @transform_0(%arg0: i32, %arg1: i32) -> (i32, i32, i32) {
    %c0_i32 = arith.constant 0 : i32
    %c0_i32_0 = arith.constant 0 : i32
    return %arg0, %arg1, %c0_i32 : i32, i32, i32
  }
  func.func @transform_1(%arg0: i32, %arg1: i32) -> (i32, i32, i32) {
    %c0_i32 = arith.constant 0 : i32
    %c0_i32_0 = arith.constant 0 : i32
    %c0_i32_1 = arith.constant 0 : i32
    return %arg0, %c0_i32, %c0_i32_0 : i32, i32, i32
  }
  func.func @transform_2(%arg0: i32, %arg1: i32) -> (i32, i32, i32) {
    %c0_i32 = arith.constant 0 : i32
    %c0_i32_0 = arith.constant 0 : i32
    %c0_i32_1 = arith.constant 0 : i32
    return %arg0, %c0_i32, %c0_i32_0 : i32, i32, i32
  }
  func.func @transform_3(%arg0: i32, %arg1: i32) -> (i32, i32, i32, i32) {
    %c0_i32 = arith.constant 0 : i32
    %c0_i32_0 = arith.constant 0 : i32
    %c0_i32_1 = arith.constant 0 : i32
    return %arg0, %c0_i32, %arg1, %c0_i32_0 : i32, i32, i32, i32
  }
  func.func @transform_4(%arg0: i32, %arg1: i32) -> (i32, i32) {
    %c0_i32 = arith.constant 0 : i32
    %c0_i32_0 = arith.constant 0 : i32
    %c0_i32_1 = arith.constant 0 : i32
    return %c0_i32, %c0_i32_0 : i32, i32
  }
  func.func @transform_5(%arg0: i32, %arg1: i32) -> (i32, i32) {
    %c0_i32 = arith.constant 0 : i32
    %c0_i32_0 = arith.constant 0 : i32
    %c0_i32_1 = arith.constant 0 : i32
    return %c0_i32, %c0_i32_0 : i32, i32
  }
  func.func @transform_6(%arg0: i32, %arg1: i32) -> (i32, i32) {
    %c0_i32 = arith.constant 0 : i32
    %c0_i32_0 = arith.constant 0 : i32
    %c0_i32_1 = arith.constant 0 : i32
    return %c0_i32, %c0_i32_0 : i32, i32
  }
  func.func @transform_7(%arg0: i32, %arg1: i32) -> (i32, i32) {
    %c0_i32 = arith.constant 0 : i32
    %c0_i32_0 = arith.constant 0 : i32
    %c0_i32_1 = arith.constant 0 : i32
    return %c0_i32, %c0_i32_0 : i32, i32
  }
  func.func @transform_8(%arg0: i32, %arg1: i32) -> (i32, i32) {
    %c0_i32 = arith.constant 0 : i32
    %c0_i32_0 = arith.constant 0 : i32
    %c0_i32_1 = arith.constant 0 : i32
    return %c0_i32, %c0_i32_0 : i32, i32
  }
  func.func @transform_9(%arg0: i32, %arg1: i32) -> (i32, i32) {
    %c0_i32 = arith.constant 0 : i32
    %c0_i32_0 = arith.constant 0 : i32
    %c0_i32_1 = arith.constant 0 : i32
    return %c0_i32, %c0_i32_0 : i32, i32
  }
  func.func @transform_10(%arg0: i32, %arg1: i32) -> (i32, i32) {
    %c0_i32 = arith.constant 0 : i32
    %c0_i32_0 = arith.constant 0 : i32
    %c0_i32_1 = arith.constant 0 : i32
    return %c0_i32, %c0_i32_0 : i32, i32
  }
  func.func @transform_11(%arg0: i32, %arg1: i32) -> (i32, i32) {
    %c0_i32 = arith.constant 0 : i32
    %c0_i32_0 = arith.constant 0 : i32
    %c0_i32_1 = arith.constant 0 : i32
    return %c0_i32, %c0_i32_0 : i32, i32
  }
  func.func @transform_12(%arg0: i32, %arg1: i32) -> (i32, i32, i32) {
    %c0_i32 = arith.constant 0 : i32
    %c0_i32_0 = arith.constant 0 : i32
    return %arg0, %arg1, %c0_i32 : i32, i32, i32
  }
}

</mosaic_0001>

<llo_original>
// kernel: tpu_custom_call.1
$region0: #{tpu_custom_call.1}
  #allocation0 [shape = 'u32[]', space=smem, size = 0x4, offset = 0x4, fixed_abs, tag = 'smem constant byte address 0x4 - core index']
  #allocation1 [shape = 'u32[72,128]{1,0:T(1,128)}', space=vmem, size = 0x9000, scoped, tag = 'internal scratch']
  #allocation2 [shape = 'bf16[8,32]{1,0:T(8,128)(2,1)}', space=vmem, size = 0x800, scoped, tag = 'scratch operand']
  #allocation3 [shape = 'bf16[8,32]{1,0:T(8,128)(2,1)}', space=vmem, size = 0x800, scoped, tag = 'scratch operand']
  #allocation4 [shape = 'bf16[8,32]{1,0:T(8,128)(2,1)}', space=vmem, size = 0x800, scoped, tag = 'scratch operand']
  %s0 = inlined_call_operand.hbm [shape: bf16[2,8,32], index: 0, kind: input, shape index: {}]
  %s1 = inlined_call_operand.hbm [shape: bf16[2,8,32], index: 1, kind: input, shape index: {}]
  %s2 = inlined_call_operand.hbm [shape: bf16[2,8,32], index: 2, kind: input, shape index: {}]
  %s3 = inlined_call_operand.hbm [shape: bf16[2,1,8,8], index: 3, kind: input, shape index: {}]
  %s4 = inlined_call_operand.hbm [shape: bf16[32,32], index: 4, kind: input, shape index: {}]
  %s5 = inlined_call_operand.vmem [shape: f32[1,32], index: 5, kind: input, shape index: {}]
  %s6 = inlined_call_operand.hbm [shape: bf16[32,32], index: 6, kind: input, shape index: {}]
  %s7 = inlined_call_operand.vmem [shape: f32[1,32], index: 7, kind: input, shape index: {}]
  %s8 = inlined_call_operand.hbm [shape: bf16[32,32], index: 8, kind: input, shape index: {}]
  %s9 = inlined_call_operand.vmem [shape: f32[1,32], index: 9, kind: input, shape index: {}]
  %s10 = inlined_call_operand.hbm [shape: bf16[32,32], index: 10, kind: input, shape index: {}]
  %s11 = inlined_call_operand.vmem [shape: f32[1,32], index: 11, kind: input, shape index: {}]
  %s12 = inlined_call_operand.hbm [shape: f32[2,8,32], index: 12, kind: output, shape index: {}]
  %s13 = sld [smem:[#allocation0]]
  $region117: #{tpu_custom_call.1} parent=0
    _
  %s15 = ssub.s32 1, %s13
  %s16 = scalar_select 0, %s15, %s13
  $region1: #{tpu_custom_call.1} parent=0
    #allocation5 [shape = 'u8[4096]{0}', space=vmem, size = 0x1000, scoped, tag = 'input window, operand 0']
    #allocation6 [shape = 's32[2]{0}', space=sflag, size = 0x8, scoped, tag = 'scoped memory for tpu_custom_call.1']
    #allocation7 [shape = 's32[2]{0}', space=sflag, size = 0x8, scoped, tag = 'scoped memory for tpu_custom_call.1']
    #allocation8 [shape = 'u8[4096]{0}', space=vmem, size = 0x1000, scoped, tag = 'input window, operand 1']
    #allocation9 [shape = 's32[2]{0}', space=sflag, size = 0x8, scoped, tag = 'scoped memory for tpu_custom_call.1']
    #allocation10 [shape = 'u8[4096]{0}', space=vmem, size = 0x1000, scoped, tag = 'input window, operand 2']
    #allocation11 [shape = 'u8[4096]{0}', space=vmem, size = 0x1000, scoped, tag = 'input window, operand 3']
    #allocation12 [shape = 's32[2]{0}', space=sflag, size = 0x8, scoped, tag = 'scoped memory for tpu_custom_call.1']
    #allocation13 [shape = 'u8[8192]{0}', space=vmem, size = 0x2000, scoped, tag = 'input window, operand 4, single buffered']
    #allocation14 [shape = 'u8[8192]{0}', space=vmem, size = 0x2000, scoped, tag = 'input window, operand 6, single buffered']
    #allocation15 [shape = 's32[1]{0}', space=sflag, size = 0x4, scoped, tag = 'scoped memory for tpu_custom_call.1']
    #allocation16 [shape = 'u8[8192]{0}', space=vmem, size = 0x2000, scoped, tag = 'input window, operand 8, single buffered']
    #allocation17 [shape = 'u8[8192]{0}', space=vmem, size = 0x2000, scoped, tag = 'input window, operand 10, single buffered']
    #allocation18 [shape = 's32[1]{0}', space=sflag, size = 0x4, scoped, tag = 'scoped memory for tpu_custom_call.1']
    #allocation19 [shape = 'u8[8192]{0}', space=vmem, size = 0x2000, scoped, tag = 'output window, operand 0']
    %17 = vsyncpa [#allocation6], 0
    %s18 = scalar_lea.sflag [#allocation6], 1
    %19 = vsyncpa %s18, 0
    %20 = vsyncpa [#allocation9], 0
    %s21 = scalar_lea.sflag [#allocation9], 1
    %22 = vsyncpa %s21, 0
    %23 = vsyncpa [#allocation12], 0
    %s24 = scalar_lea.sflag [#allocation12], 1
    %25 = vsyncpa %s24, 0
    %26 = vsyncpa [#allocation15], 0
    %27 = vsyncpa [#allocation18], 0
    %28 = vsyncpa [#allocation7], 0
    %s29 = scalar_lea.sflag [#allocation7], 1
    %30 = vsyncpa %s29, 0
    loop: start=0, step=1, limit=4
    $region2: #{tpu_custom_call.1} parent=1 // loop_pre_header
      _
    $region3: #{tpu_custom_call.1} parent=1 // loop_header
      %s32 = sphi 0, %s36
      %p33 = scmp.ge.s32.totalorder %s32, 4
      %s39 = sphi 0, %s51
      %s40 = sphi 0, %s47
      %s41 = sphi 0, %s39
      %s42 = sphi 0, %s40
      %s43 = sphi 0, %s41
      %s44 = sphi 0, %s42
      %s56 = sphi 0, %s58
      %s59 = sphi 0, %s56
      %s60 = sphi 0, %s59
      %s76 = sphi 0, %s60
      %s82 = sphi 0, %s84
      %s85 = sphi 0, %s82
      %s86 = sphi 0, %s85
      %s102 = sphi 0, %s86
      %s108 = sphi 0, %s110
      %s111 = sphi 0, %s108
      %s112 = sphi 0, %s111
      %s128 = sphi 0, %s112
      %s136 = sphi 0, %s138
      %s139 = sphi 0, %s136
      %s140 = sphi 0, %s139
      %s156 = sphi 0, %s140
      %s160 = sphi 0, %s160
      %s162 = sphi 0, %s160
      %s163 = sphi 0, %s162
      %s177 = sphi 0, %s163
      %s181 = sphi 0, %s181
      %s183 = sphi 0, %s181
      %s184 = sphi 0, %s183
      %s198 = sphi 0, %s184
      %s202 = sphi 0, %s202
      %s204 = sphi 0, %s202
      %s205 = sphi 0, %s204
      %s219 = sphi 0, %s205
      %s223 = sphi 0, %s223
      %s225 = sphi 0, %s223
      %s226 = sphi 0, %s225
      %s240 = sphi 0, %s226
      %s244 = sphi 0, %s244
      %s246 = sphi 0, %s244
      %s247 = sphi 0, %s246
      %s261 = sphi 0, %s247
      %s265 = sphi 0, %s265
      %s267 = sphi 0, %s265
      %s268 = sphi 0, %s267
      %s282 = sphi 0, %s268
      %s286 = sphi 0, %s286
      %s288 = sphi 0, %s286
      %s289 = sphi 0, %s288
      %s303 = sphi 0, %s289
      %s307 = sphi 0, %s307
      %s309 = sphi 0, %s307
      %s310 = sphi 0, %s309
      %s324 = sphi 0, %s310
      %s332 = sphi 0, %s334
      %s335 = sphi 0, %s332
      %s336 = sphi 0, %s335
      %s352 = sphi 0, %s336
    $region4: #{tpu_custom_call.1} parent=1 // loop_header_branch
      %35 = sbr.rel (%p33) target = $region8
    $region5: #{tpu_custom_call.1} parent=1 // loop_body
      %s37 = ssub.s32 %s32, 1
      %s38 = ssub.s32 %s32, 2
      %s45 = sadd.s32 1, %s40
      %p46 = scmp.ge.s32.totalorder %s45, 1
      %s47 = scalar_select %p46, 0, %s45
      %s48 = sadd.s32 1, %s39
      %s49 = scalar_select %p46, %s48, %s39
      %p50 = scmp.ge.s32.totalorder %s49, 2
      %s51 = scalar_select %p50, 0, %s49
      %s52 = ssub.s32 %s39, %s51
      %s53 = ssub.s32 %s40, %s47
      %s54 = sor.u32 %s52, %s53
      %p55 = scmp.eq.s32.totalorder %s54, 0
      %s57 = sadd.s32 %s56, 1
      %s58 = scalar_select %p55, %s56, %s57
      %p61 = pneg %p55
      %p62 = scmp.eq.s32.totalorder %s32, 1
      %p63 = por %p61, %p62
      %p64 = scmp.ne.s32.totalorder %s56, %s59
      %p65 = scmp.eq.s32.totalorder %s32, 0
      %p66 = por %p64, %p65
      %p67 = scmp.ne.s32.totalorder %s56, %s59
      %p68 = scmp.eq.s32.totalorder %s37, 1
      %p69 = por %p67, %p68
      %p70 = scmp.ne.s32.totalorder %s59, %s60
      %p71 = scmp.eq.s32.totalorder %s37, 0
      %p72 = por %p70, %p71
      %p73 = scmp.ne.s32.totalorder %s59, %s60
      %p74 = scmp.eq.s32.totalorder %s38, 1
      %p75 = por %p73, %p74
      %p77 = scmp.ne.s32.totalorder %s60, %s76
      %p78 = scmp.eq.s32.totalorder %s38, 0
      %p79 = por %p77, %p78
      %s80 = ssub.s32 %s39, %s51
      %p81 = scmp.eq.s32.totalorder %s80, 0
      %s83 = sadd.s32 %s82, 1
      %s84 = scalar_select %p81, %s82, %s83
      %p87 = pneg %p81
      %p88 = scmp.eq.s32.totalorder %s32, 1
      %p89 = por %p87, %p88
      %p90 = scmp.ne.s32.totalorder %s82, %s85
      %p91 = scmp.eq.s32.totalorder %s32, 0
      %p92 = por %p90, %p91
      %p93 = scmp.ne.s32.totalorder %s82, %s85
      %p94 = scmp.eq.s32.totalorder %s37, 1
      %p95 = por %p93, %p94
      %p96 = scmp.ne.s32.totalorder %s85, %s86
      %p97 = scmp.eq.s32.totalorder %s37, 0
      %p98 = por %p96, %p97
      %p99 = scmp.ne.s32.totalorder %s85, %s86
      %p100 = scmp.eq.s32.totalorder %s38, 1
      %p101 = por %p99, %p100
      %p103 = scmp.ne.s32.totalorder %s86, %s102
      %p104 = scmp.eq.s32.totalorder %s38, 0
      %p105 = por %p103, %p104
      %s106 = ssub.s32 %s39, %s51
      %p107 = scmp.eq.s32.totalorder %s106, 0
      %s109 = sadd.s32 %s108, 1
      %s110 = scalar_select %p107, %s108, %s109
      %p113 = pneg %p107
      %p114 = scmp.eq.s32.totalorder %s32, 1
      %p115 = por %p113, %p114
      %p116 = scmp.ne.s32.totalorder %s108, %s111
      %p117 = scmp.eq.s32.totalorder %s32, 0
      %p118 = por %p116, %p117
      %p119 = scmp.ne.s32.totalorder %s108, %s111
      %p120 = scmp.eq.s32.totalorder %s37, 1
      %p121 = por %p119, %p120
      %p122 = scmp.ne.s32.totalorder %s111, %s112
      %p123 = scmp.eq.s32.totalorder %s37, 0
      %p124 = por %p122, %p123
      %p125 = scmp.ne.s32.totalorder %s111, %s112
      %p126 = scmp.eq.s32.totalorder %s38, 1
      %p127 = por %p125, %p126
      %p129 = scmp.ne.s32.totalorder %s112, %s128
      %p130 = scmp.eq.s32.totalorder %s38, 0
      %p131 = por %p129, %p130
      %s132 = ssub.s32 %s39, %s51
      %s133 = ssub.s32 %s40, %s47
      %s134 = sor.u32 %s132, %s133
      %p135 = scmp.eq.s32.totalorder %s134, 0
      %s137 = sadd.s32 %s136, 1
      %s138 = scalar_select %p135, %s136, %s137
      %p141 = pneg %p135
      %p142 = scmp.eq.s32.totalorder %s32, 1
      %p143 = por %p141, %p142
      %p144 = scmp.ne.s32.totalorder %s136, %s139
      %p145 = scmp.eq.s32.totalorder %s32, 0
      %p146 = por %p144, %p145
      %p147 = scmp.ne.s32.totalorder %s136, %s139
      %p148 = scmp.eq.s32.totalorder %s37, 1
      %p149 = por %p147, %p148
      %p150 = scmp.ne.s32.totalorder %s139, %s140
      %p151 = scmp.eq.s32.totalorder %s37, 0
      %p152 = por %p150, %p151
      %p153 = scmp.ne.s32.totalorder %s139, %s140
      %p154 = scmp.eq.s32.totalorder %s38, 1
      %p155 = por %p153, %p154
      %p157 = scmp.ne.s32.totalorder %s140, %s156
      %p158 = scmp.eq.s32.totalorder %s38, 0
      %p159 = por %p157, %p158
      %s161 = sadd.s32 %s160, 1
      %p164 = scmp.eq.s32.totalorder %s32, 1
      %p165 = scmp.ne.s32.totalorder %s160, %s162
      %p166 = scmp.eq.s32.totalorder %s32, 0
      %p167 = por %p165, %p166
      %p168 = scmp.ne.s32.totalorder %s160, %s162
      %p169 = scmp.eq.s32.totalorder %s37, 1
      %p170 = por %p168, %p169
      %p171 = scmp.ne.s32.totalorder %s162, %s163
      %p172 = scmp.eq.s32.totalorder %s37, 0
      %p173 = por %p171, %p172
      %p174 = scmp.ne.s32.totalorder %s162, %s163
      %p175 = scmp.eq.s32.totalorder %s38, 1
      %p176 = por %p174, %p175
      %p178 = scmp.ne.s32.totalorder %s163, %s177
      %p179 = scmp.eq.s32.totalorder %s38, 0
      %p180 = por %p178, %p179
      %s182 = sadd.s32 %s181, 1
      %p185 = scmp.eq.s32.totalorder %s32, 1
      %p186 = scmp.ne.s32.totalorder %s181, %s183
      %p187 = scmp.eq.s32.totalorder %s32, 0
      %p188 = por %p186, %p187
      %p189 = scmp.ne.s32.totalorder %s181, %s183
      %p190 = scmp.eq.s32.totalorder %s37, 1
      %p191 = por %p189, %p190
      %p192 = scmp.ne.s32.totalorder %s183, %s184
      %p193 = scmp.eq.s32.totalorder %s37, 0
      %p194 = por %p192, %p193
      %p195 = scmp.ne.s32.totalorder %s183, %s184
      %p196 = scmp.eq.s32.totalorder %s38, 1
      %p197 = por %p195, %p196
      %p199 = scmp.ne.s32.totalorder %s184, %s198
      %p200 = scmp.eq.s32.totalorder %s38, 0
      %p201 = por %p199, %p200
      %s203 = sadd.s32 %s202, 1
      %p206 = scmp.eq.s32.totalorder %s32, 1
      %p207 = scmp.ne.s32.totalorder %s202, %s204
      %p208 = scmp.eq.s32.totalorder %s32, 0
      %p209 = por %p207, %p208
      %p210 = scmp.ne.s32.totalorder %s202, %s204
      %p211 = scmp.eq.s32.totalorder %s37, 1
      %p212 = por %p210, %p211
      %p213 = scmp.ne.s32.totalorder %s204, %s205
      %p214 = scmp.eq.s32.totalorder %s37, 0
      %p215 = por %p213, %p214
      %p216 = scmp.ne.s32.totalorder %s204, %s205
      %p217 = scmp.eq.s32.totalorder %s38, 1
      %p218 = por %p216, %p217
      %p220 = scmp.ne.s32.totalorder %s205, %s219
      %p221 = scmp.eq.s32.totalorder %s38, 0
      %p222 = por %p220, %p221
      %s224 = sadd.s32 %s223, 1
      %p227 = scmp.eq.s32.totalorder %s32, 1
      %p228 = scmp.ne.s32.totalorder %s223, %s225
      %p229 = scmp.eq.s32.totalorder %s32, 0
      %p230 = por %p228, %p229
      %p231 = scmp.ne.s32.totalorder %s223, %s225
      %p232 = scmp.eq.s32.totalorder %s37, 1
      %p233 = por %p231, %p232
      %p234 = scmp.ne.s32.totalorder %s225, %s226
      %p235 = scmp.eq.s32.totalorder %s37, 0
      %p236 = por %p234, %p235
      %p237 = scmp.ne.s32.totalorder %s225, %s226
      %p238 = scmp.eq.s32.totalorder %s38, 1
      %p239 = por %p237, %p238
      %p241 = scmp.ne.s32.totalorder %s226, %s240
      %p242 = scmp.eq.s32.totalorder %s38, 0
      %p243 = por %p241, %p242
      %s245 = sadd.s32 %s244, 1
      %p248 = scmp.eq.s32.totalorder %s32, 1
      %p249 = scmp.ne.s32.totalorder %s244, %s246
      %p250 = scmp.eq.s32.totalorder %s32, 0
      %p251 = por %p249, %p250
      %p252 = scmp.ne.s32.totalorder %s244, %s246
      %p253 = scmp.eq.s32.totalorder %s37, 1
      %p254 = por %p252, %p253
      %p255 = scmp.ne.s32.totalorder %s246, %s247
      %p256 = scmp.eq.s32.totalorder %s37, 0
      %p257 = por %p255, %p256
      %p258 = scmp.ne.s32.totalorder %s246, %s247
      %p259 = scmp.eq.s32.totalorder %s38, 1
      %p260 = por %p258, %p259
      %p262 = scmp.ne.s32.totalorder %s247, %s261
      %p263 = scmp.eq.s32.totalorder %s38, 0
      %p264 = por %p262, %p263
      %s266 = sadd.s32 %s265, 1
      %p269 = scmp.eq.s32.totalorder %s32, 1
      %p270 = scmp.ne.s32.totalorder %s265, %s267
      %p271 = scmp.eq.s32.totalorder %s32, 0
      %p272 = por %p270, %p271
      %p273 = scmp.ne.s32.totalorder %s265, %s267
      %p274 = scmp.eq.s32.totalorder %s37, 1
      %p275 = por %p273, %p274
      %p276 = scmp.ne.s32.totalorder %s267, %s268
      %p277 = scmp.eq.s32.totalorder %s37, 0
      %p278 = por %p276, %p277
      %p279 = scmp.ne.s32.totalorder %s267, %s268
      %p280 = scmp.eq.s32.totalorder %s38, 1
      %p281 = por %p279, %p280
      %p283 = scmp.ne.s32.totalorder %s268, %s282
      %p284 = scmp.eq.s32.totalorder %s38, 0
      %p285 = por %p283, %p284
      %s287 = sadd.s32 %s286, 1
      %p290 = scmp.eq.s32.totalorder %s32, 1
      %p291 = scmp.ne.s32.totalorder %s286, %s288
      %p292 = scmp.eq.s32.totalorder %s32, 0
      %p293 = por %p291, %p292
      %p294 = scmp.ne.s32.totalorder %s286, %s288
      %p295 = scmp.eq.s32.totalorder %s37, 1
      %p296 = por %p294, %p295
      %p297 = scmp.ne.s32.totalorder %s288, %s289
      %p298 = scmp.eq.s32.totalorder %s37, 0
      %p299 = por %p297, %p298
      %p300 = scmp.ne.s32.totalorder %s288, %s289
      %p301 = scmp.eq.s32.totalorder %s38, 1
      %p302 = por %p300, %p301
      %p304 = scmp.ne.s32.totalorder %s289, %s303
      %p305 = scmp.eq.s32.totalorder %s38, 0
      %p306 = por %p304, %p305
      %s308 = sadd.s32 %s307, 1
      %p311 = scmp.eq.s32.totalorder %s32, 1
      %p312 = scmp.ne.s32.totalorder %s307, %s309
      %p313 = scmp.eq.s32.totalorder %s32, 0
      %p314 = por %p312, %p313
      %p315 = scmp.ne.s32.totalorder %s307, %s309
      %p316 = scmp.eq.s32.totalorder %s37, 1
      %p317 = por %p315, %p316
      %p318 = scmp.ne.s32.totalorder %s309, %s310
      %p319 = scmp.eq.s32.totalorder %s37, 0
      %p320 = por %p318, %p319
      %p321 = scmp.ne.s32.totalorder %s309, %s310
      %p322 = scmp.eq.s32.totalorder %s38, 1
      %p323 = por %p321, %p322
      %p325 = scmp.ne.s32.totalorder %s310, %s324
      %p326 = scmp.eq.s32.totalorder %s38, 0
      %p327 = por %p325, %p326
      %s328 = ssub.s32 %s39, %s51
      %s329 = ssub.s32 %s40, %s47
      %s330 = sor.u32 %s328, %s329
      %p331 = scmp.eq.s32.totalorder %s330, 0
      %s333 = sadd.s32 %s332, 1
      %s334 = scalar_select %p331, %s332, %s333
      %p337 = pneg %p331
      %p338 = scmp.eq.s32.totalorder %s32, 1
      %p339 = por %p337, %p338
      %p340 = scmp.ne.s32.totalorder %s332, %s335
      %p341 = scmp.eq.s32.totalorder %s32, 0
      %p342 = por %p340, %p341
      %p343 = scmp.ne.s32.totalorder %s332, %s335
      %p344 = scmp.eq.s32.totalorder %s37, 1
      %p345 = por %p343, %p344
      %p346 = scmp.ne.s32.totalorder %s335, %s336
      %p347 = scmp.eq.s32.totalorder %s37, 0
      %p348 = por %p346, %p347
      %p349 = scmp.ne.s32.totalorder %s335, %s336
      %p350 = scmp.eq.s32.totalorder %s38, 1
      %p351 = por %p349, %p350
      %p353 = scmp.ne.s32.totalorder %s336, %s352
      %p354 = scmp.eq.s32.totalorder %s38, 0
      %p355 = por %p353, %p354
      %p356 = scmp.le.s32.totalorder 1, %s32
      %p357 = scmp.lt.s32.totalorder %s32, 3
      %p358 = pnand %p356, %p357
      %p359 = pneg %p358
      // Predicated region
      $region9: #{tpu_custom_call.1} parent=5 // pred_check
        _
      $region10: #{tpu_custom_call.1} parent=5 // pred_check_branch
        %361 = sbr.rel (%p358) target = $region12
      $region11: #{tpu_custom_call.1} parent=5 // pred_region
        %s362 = ssub.s32 %s32, 1
        // Predicated region
        $region13: #{tpu_custom_call.1} parent=11 // pred_check
          %p363 = pneg %p173
        $region14: #{tpu_custom_call.1} parent=11 // pred_check_branch
          %365 = sbr.rel (%p363) target = $region16
        $region15: #{tpu_custom_call.1} parent=11 // pred_region
          %367 = vsyncadd [#allocation12], 0
          %s368 = sshll.u32 %s4, 4
          %s369 = int_to_ptr.hbm [resolvable:$true] %s368
          %s370 = sshll.u32 [#allocation13], 4
          %s371 = int_to_ptr.vmem [resolvable:$true] %s370
          %376 = dma.hbm_to_vmem [thread:$0]  %s369, 256, %s371, [#allocation12], 64, 64, 4
        $region16: #{tpu_custom_call.1} parent=11 // pred_fallthru
          _
        // Predicated region
        $region17: #{tpu_custom_call.1} parent=11 // pred_check
          %p377 = pneg %p194
        $region18: #{tpu_custom_call.1} parent=11 // pred_check_branch
          %379 = sbr.rel (%p377) target = $region20
        $region19: #{tpu_custom_call.1} parent=11 // pred_region
          _
        $region20: #{tpu_custom_call.1} parent=11 // pred_fallthru
          _
        // Predicated region
        $region21: #{tpu_custom_call.1} parent=11 // pred_check
          %p380 = pneg %p215
        $region22: #{tpu_custom_call.1} parent=11 // pred_check_branch
          %382 = sbr.rel (%p380) target = $region24
        $region23: #{tpu_custom_call.1} parent=11 // pred_region
          %384 = vsyncadd [#allocation15], 0
          %s385 = sshll.u32 %s6, 4
          %s386 = int_to_ptr.hbm [resolvable:$true] %s385
          %s387 = sshll.u32 [#allocation14], 4
          %s388 = int_to_ptr.vmem [resolvable:$true] %s387
          %393 = dma.hbm_to_vmem [thread:$0]  %s386, 256, %s388, [#allocation15], 64, 64, 4
        $region24: #{tpu_custom_call.1} parent=11 // pred_fallthru
          _
        // Predicated region
        $region25: #{tpu_custom_call.1} parent=11 // pred_check
          %p394 = pneg %p236
        $region26: #{tpu_custom_call.1} parent=11 // pred_check_branch
          %396 = sbr.rel (%p394) target = $region28
        $region27: #{tpu_custom_call.1} parent=11 // pred_region
          _
        $region28: #{tpu_custom_call.1} parent=11 // pred_fallthru
          _
        // Predicated region
        $region29: #{tpu_custom_call.1} parent=11 // pred_check
          %p397 = pneg %p257
        $region30: #{tpu_custom_call.1} parent=11 // pred_check_branch
          %399 = sbr.rel (%p397) target = $region32
        $region31: #{tpu_custom_call.1} parent=11 // pred_region
          %401 = vsyncadd [#allocation15], 0
          %s402 = sshll.u32 %s8, 4
          %s403 = int_to_ptr.hbm [resolvable:$true] %s402
          %s404 = sshll.u32 [#allocation16], 4
          %s405 = int_to_ptr.vmem [resolvable:$true] %s404
          %410 = dma.hbm_to_vmem [thread:$0]  %s403, 256, %s405, [#allocation15], 64, 64, 4
        $region32: #{tpu_custom_call.1} parent=11 // pred_fallthru
          _
        // Predicated region
        $region33: #{tpu_custom_call.1} parent=11 // pred_check
          %p411 = pneg %p278
        $region34: #{tpu_custom_call.1} parent=11 // pred_check_branch
          %413 = sbr.rel (%p411) target = $region36
        $region35: #{tpu_custom_call.1} parent=11 // pred_region
          _
        $region36: #{tpu_custom_call.1} parent=11 // pred_fallthru
          _
        // Predicated region
        $region37: #{tpu_custom_call.1} parent=11 // pred_check
          %p414 = pneg %p299
        $region38: #{tpu_custom_call.1} parent=11 // pred_check_branch
          %416 = sbr.rel (%p414) target = $region40
        $region39: #{tpu_custom_call.1} parent=11 // pred_region
          %418 = vsyncadd [#allocation18], 0
          %s419 = sshll.u32 %s10, 4
          %s420 = int_to_ptr.hbm [resolvable:$true] %s419
          %s421 = sshll.u32 [#allocation17], 4
          %s422 = int_to_ptr.vmem [resolvable:$true] %s421
          %427 = dma.hbm_to_vmem [thread:$0]  %s420, 256, %s422, [#allocation18], 64, 64, 4
        $region40: #{tpu_custom_call.1} parent=11 // pred_fallthru
          _
        // Predicated region
        $region41: #{tpu_custom_call.1} parent=11 // pred_check
          %p428 = pneg %p320
        $region42: #{tpu_custom_call.1} parent=11 // pred_check_branch
          %430 = sbr.rel (%p428) target = $region44
        $region43: #{tpu_custom_call.1} parent=11 // pred_region
          _
        $region44: #{tpu_custom_call.1} parent=11 // pred_fallthru
          _
      $region12: #{tpu_custom_call.1} parent=5 // pred_fallthru
        _
      %p431 = scmp.lt.s32.totalorder %s32, 2
      // Predicated region
      $region45: #{tpu_custom_call.1} parent=5 // pred_check
        %p432 = pneg %p431
      $region46: #{tpu_custom_call.1} parent=5 // pred_check_branch
        %434 = sbr.rel (%p432) target = $region48
      $region47: #{tpu_custom_call.1} parent=5 // pred_region
        // Predicated region
        $region49: #{tpu_custom_call.1} parent=47 // pred_check
          %p435 = pneg %p66
        $region50: #{tpu_custom_call.1} parent=47 // pred_check_branch
          %437 = sbr.rel (%p435) target = $region52
        $region51: #{tpu_custom_call.1} parent=47 // pred_region
          %s438 = sand.u32 %s56, 1
          %s439 = scalar_lea.sflag [#allocation6], %s438
          %s440 = sand.u32 %s56, 1
          %s441 = smul.addr %s440, 4
          %s442 = scalar_lea.vmem [#allocation5], %s441
          %444 = vsyncadd %s439, 0
          %s445 = sadd.s32 %s40, %s39
          %s446 = smul.addr %s445, 4
          %s447 = scalar_lea.hbm %s0, %s446
          %s449 = sshll.u32 %s447, 4
          %s450 = int_to_ptr.hbm [resolvable:$true] %s449
          %s451 = sshll.u32 %s442, 4
          %s452 = int_to_ptr.vmem [resolvable:$true] %s451
          %454 = dma.hbm_to_vmem [thread:$0]  %s450, 64, %s452, %s439
        $region52: #{tpu_custom_call.1} parent=47 // pred_fallthru
          _
        // Predicated region
        $region53: #{tpu_custom_call.1} parent=47 // pred_check
          %p455 = pneg %p92
        $region54: #{tpu_custom_call.1} parent=47 // pred_check_branch
          %457 = sbr.rel (%p455) target = $region56
        $region55: #{tpu_custom_call.1} parent=47 // pred_region
          %s458 = sand.u32 %s32, 1
          %s459 = scalar_lea.sflag [#allocation9], %s458
          %s460 = sand.u32 %s82, 1
          %s461 = smul.addr %s460, 4
          %s462 = scalar_lea.vmem [#allocation8], %s461
          %464 = vsyncadd %s459, 0
          %s465 = smul.addr %s39, 4
          %s466 = scalar_lea.hbm %s1, %s465
          %s468 = sshll.u32 %s466, 4
          %s469 = int_to_ptr.hbm [resolvable:$true] %s468
          %s470 = sshll.u32 %s462, 4
          %s471 = int_to_ptr.vmem [resolvable:$true] %s470
          %473 = dma.hbm_to_vmem [thread:$0]  %s469, 64, %s471, %s459
        $region56: #{tpu_custom_call.1} parent=47 // pred_fallthru
          _
        // Predicated region
        $region57: #{tpu_custom_call.1} parent=47 // pred_check
          %p474 = pneg %p118
        $region58: #{tpu_custom_call.1} parent=47 // pred_check_branch
          %476 = sbr.rel (%p474) target = $region60
        $region59: #{tpu_custom_call.1} parent=47 // pred_region
          %s477 = sand.u32 %s32, 1
          %s478 = scalar_lea.sflag [#allocation9], %s477
          %s479 = sand.u32 %s108, 1
          %s480 = smul.addr %s479, 4
          %s481 = scalar_lea.vmem [#allocation10], %s480
          %483 = vsyncadd %s478, 0
          %s484 = smul.addr %s39, 4
          %s485 = scalar_lea.hbm %s2, %s484
          %s487 = sshll.u32 %s485, 4
          %s488 = int_to_ptr.hbm [resolvable:$true] %s487
          %s489 = sshll.u32 %s481, 4
          %s490 = int_to_ptr.vmem [resolvable:$true] %s489
          %492 = dma.hbm_to_vmem [thread:$0]  %s488, 64, %s490, %s478
        $region60: #{tpu_custom_call.1} parent=47 // pred_fallthru
          _
        // Predicated region
        $region61: #{tpu_custom_call.1} parent=47 // pred_check
          %p493 = pneg %p146
        $region62: #{tpu_custom_call.1} parent=47 // pred_check_branch
          %495 = sbr.rel (%p493) target = $region64
        $region63: #{tpu_custom_call.1} parent=47 // pred_region
          %s496 = sand.u32 %s32, 1
          %s497 = scalar_lea.sflag [#allocation12], %s496
          %s498 = sand.u32 %s136, 1
          %s499 = smul.addr %s498, 4
          %s500 = scalar_lea.vmem [#allocation11], %s499
          %502 = vsyncadd %s497, 0
          %s503 = sadd.s32 %s40, %s39
          %s504 = smul.addr %s503, 4
          %s505 = scalar_lea.hbm %s3, %s504
          %s507 = sshll.u32 %s505, 4
          %s508 = int_to_ptr.hbm [resolvable:$true] %s507
          %s509 = sshll.u32 %s500, 4
          %s510 = int_to_ptr.vmem [resolvable:$true] %s509
          %512 = dma.hbm_to_vmem [thread:$0]  %s508, 64, %s510, %s497
        $region64: #{tpu_custom_call.1} parent=47 // pred_fallthru
          _
      $region48: #{tpu_custom_call.1} parent=5 // pred_fallthru
        _
      %p513 = scmp.le.s32.totalorder 1, %s32
      %p514 = scmp.lt.s32.totalorder %s32, 3
      %p515 = pnand %p513, %p514
      %p516 = pneg %p515
      // Predicated region
      $region65: #{tpu_custom_call.1} parent=5 // pred_check
        _
      $region66: #{tpu_custom_call.1} parent=5 // pred_check_branch
        %518 = sbr.rel (%p515) target = $region68
      $region67: #{tpu_custom_call.1} parent=5 // pred_region
        %s519 = ssub.s32 %s32, 1
        %s520 = sand.u32 %s59, 1
        %s521 = scalar_lea.sflag [#allocation6], %s520
        %s522 = sand.u32 %s59, 1
        %s523 = smul.addr %s522, 4
        %s524 = scalar_lea.vmem [#allocation5], %s523
        // Predicated region
        $region69: #{tpu_custom_call.1} parent=67 // pred_check
          %p525 = pneg %p72
        $region70: #{tpu_custom_call.1} parent=67 // pred_check_branch
          %527 = sbr.rel (%p525) target = $region72
        $region71: #{tpu_custom_call.1} parent=67 // pred_region
          %529 = dma.done %s521, 64
        $region72: #{tpu_custom_call.1} parent=67 // pred_fallthru
          _
        %s530 = sand.u32 %s37, 1
        %s531 = scalar_lea.sflag [#allocation9], %s530
        %s532 = sand.u32 %s85, 1
        %s533 = smul.addr %s532, 4
        %s534 = scalar_lea.vmem [#allocation8], %s533
        // Predicated region
        $region73: #{tpu_custom_call.1} parent=67 // pred_check
          %p535 = pneg %p98
        $region74: #{tpu_custom_call.1} parent=67 // pred_check_branch
          %537 = sbr.rel (%p535) target = $region76
        $region75: #{tpu_custom_call.1} parent=67 // pred_region
          %539 = dma.done %s531, 64
        $region76: #{tpu_custom_call.1} parent=67 // pred_fallthru
          _
        %s540 = sand.u32 %s37, 1
        %s541 = scalar_lea.sflag [#allocation9], %s540
        %s542 = sand.u32 %s111, 1
        %s543 = smul.addr %s542, 4
        %s544 = scalar_lea.vmem [#allocation10], %s543
        // Predicated region
        $region77: #{tpu_custom_call.1} parent=67 // pred_check
          %p545 = pneg %p124
        $region78: #{tpu_custom_call.1} parent=67 // pred_check_branch
          %547 = sbr.rel (%p545) target = $region80
        $region79: #{tpu_custom_call.1} parent=67 // pred_region
          %549 = dma.done %s541, 64
        $region80: #{tpu_custom_call.1} parent=67 // pred_fallthru
          _
        %s550 = sand.u32 %s37, 1
        %s551 = scalar_lea.sflag [#allocation12], %s550
        %s552 = sand.u32 %s139, 1
        %s553 = smul.addr %s552, 4
        %s554 = scalar_lea.vmem [#allocation11], %s553
        // Predicated region
        $region81: #{tpu_custom_call.1} parent=67 // pred_check
          %p555 = pneg %p152
        $region82: #{tpu_custom_call.1} parent=67 // pred_check_branch
          %557 = sbr.rel (%p555) target = $region84
        $region83: #{tpu_custom_call.1} parent=67 // pred_region
          %559 = dma.done %s551, 64
        $region84: #{tpu_custom_call.1} parent=67 // pred_fallthru
          _
        // Predicated region
        $region85: #{tpu_custom_call.1} parent=67 // pred_check
          %p560 = pneg %p173
        $region86: #{tpu_custom_call.1} parent=67 // pred_check_branch
          %562 = sbr.rel (%p560) target = $region88
        $region87: #{tpu_custom_call.1} parent=67 // pred_region
          %564 = dma.done [#allocation12], 256
        $region88: #{tpu_custom_call.1} parent=67 // pred_fallthru
          _
        // Predicated region
        $region89: #{tpu_custom_call.1} parent=67 // pred_check
          %p565 = pneg %p215
        $region90: #{tpu_custom_call.1} parent=67 // pred_check_branch
          %567 = sbr.rel (%p565) target = $region92
        $region91: #{tpu_custom_call.1} parent=67 // pred_region
          %569 = dma.done [#allocation15], 256
        $region92: #{tpu_custom_call.1} parent=67 // pred_fallthru
          _
        // Predicated region
        $region93: #{tpu_custom_call.1} parent=67 // pred_check
          %p570 = pneg %p257
        $region94: #{tpu_custom_call.1} parent=67 // pred_check_branch
          %572 = sbr.rel (%p570) target = $region96
        $region95: #{tpu_custom_call.1} parent=67 // pred_region
          %574 = dma.done [#allocation15], 256
        $region96: #{tpu_custom_call.1} parent=67 // pred_fallthru
          _
        // Predicated region
        $region97: #{tpu_custom_call.1} parent=67 // pred_check
          %p575 = pneg %p299
        $region98: #{tpu_custom_call.1} parent=67 // pred_check_branch
          %577 = sbr.rel (%p575) target = $region100
        $region99: #{tpu_custom_call.1} parent=67 // pred_region
          %579 = dma.done [#allocation18], 256
        $region100: #{tpu_custom_call.1} parent=67 // pred_fallthru
          _
        %s580 = sand.u32 %s59, 1
        %s581 = scalar_lea.sflag [#allocation6], %s580
        %s582 = sand.u32 %s59, 1
        %s583 = smul.addr %s582, 4
        %s584 = scalar_lea.vmem [#allocation5], %s583
        %p585 = pneg %p72
        %p586 = pneg %p69
        %s587 = sand.u32 %s37, 1
        %s588 = scalar_lea.sflag [#allocation9], %s587
        %s589 = sand.u32 %s85, 1
        %s590 = smul.addr %s589, 4
        %s591 = scalar_lea.vmem [#allocation8], %s590
        %p592 = pneg %p98
        %p593 = pneg %p95
        %s594 = sand.u32 %s37, 1
        %s595 = scalar_lea.sflag [#allocation9], %s594
        %s596 = sand.u32 %s111, 1
        %s597 = smul.addr %s596, 4
        %s598 = scalar_lea.vmem [#allocation10], %s597
        %p599 = pneg %p124
        %p600 = pneg %p121
        %s601 = sand.u32 %s37, 1
        %s602 = scalar_lea.sflag [#allocation12], %s601
        %s603 = sand.u32 %s139, 1
        %s604 = smul.addr %s603, 4
        %s605 = scalar_lea.vmem [#allocation11], %s604
        %p606 = pneg %p152
        %p607 = pneg %p149
        %p608 = pneg %p173
        %p609 = pneg %p170
        %p610 = pneg %p194
        %p611 = pneg %p191
        %p612 = pneg %p215
        %p613 = pneg %p212
        %p614 = pneg %p236
        %p615 = pneg %p233
        %p616 = pneg %p257
        %p617 = pneg %p254
        %p618 = pneg %p278
        %p619 = pneg %p275
        %p620 = pneg %p299
        %p621 = pneg %p296
        %p622 = pneg %p320
        %p623 = pneg %p317
        %p624 = pneg %p348
        %p625 = pneg %p345
        %s626 = sand.u32 %s335, 1
        %s627 = scalar_lea.sflag [#allocation7], %s626
        %s628 = sand.u32 %s335, 1
        %s629 = smul.addr %s628, 8
        %s630 = scalar_lea.vmem [#allocation19], %s629
        %p632 = scmp.eq.s32.totalorder %s42, 0
        // Predicated region
        $region101: #{tpu_custom_call.1} parent=67 // pred_check
          %p633 = pneg %p632
        $region102: #{tpu_custom_call.1} parent=67 // pred_check_branch
          %635 = sbr.rel (%p633) target = $region104
        $region103: #{tpu_custom_call.1} parent=67 // pred_region
          %v636 = vld [vmem:[%s534] sm:$0xf]
          %v637 = vld [vmem:[%s544] sm:$0xf]
          %v638 = vld [vmem:[#allocation14] sm:$0xf]
          %v639 = vld [vmem:[#allocation14 + $0x4] sm:$0xf]
          %v640 = vld [vmem:[#allocation14 + $0x8] sm:$0xf]
          %v641 = vld [vmem:[#allocation14 + $0xc] sm:$0xf]
          %v642 = vld [vmem:[%s7] sm:$0x1]
          %v644 = vperm.slane %v642, 0
          %v650 = vunpack.c.l.b16 %v638
          %v651 = vunpack.c.l.b16 %v639
          %v652 = vunpack.c.l.b16 %v640
          %v653 = vunpack.c.l.b16 %v641
          %v654 = vpack.c.b16 %v651, %v650
          %v655 = vpack.c.b16 %v653, %v652
          %vm658 = vcmask 261120
          %v660 = vsel %vm658, %v636, 0
          %662 = vmatpush.bf16.msra.mxu0 0
          %663 = vmatpush.bf16.msra.mxu0 0
          %664 = vmatpush.bf16.msra.mxu0 0
          %665 = vmatpush.bf16.msra.mxu0 0
          %666 = vmatpush.bf16.msra.mxu0 0
          %667 = vmatpush.bf16.msra.mxu0 0
          %668 = vmatpush.bf16.msra.mxu0 %v655
          %669 = vmatpush.bf16.msra.mxu0 %v654
          %670 = vmatmul.bf16.gmra.mxu0 %v660
          %v671 = vpop.f32.mrf.mxu0
          %v672 = vadd.f32 %v644, %v671
          %v673 = vpop.f32.mrf.mxu0
          %674 = vdwg.mxu0
          %v675 = vld [vmem:[#allocation16] sm:$0xf]
          %v676 = vld [vmem:[#allocation16 + $0x4] sm:$0xf]
          %v677 = vld [vmem:[#allocation16 + $0x8] sm:$0xf]
          %v678 = vld [vmem:[#allocation16 + $0xc] sm:$0xf]
          %v679 = vld [vmem:[%s9] sm:$0x1]
          %v681 = vperm.slane %v679, 0
          %v687 = vunpack.c.l.b16 %v675
          %v688 = vunpack.c.l.b16 %v676
          %v689 = vunpack.c.l.b16 %v677
          %v690 = vunpack.c.l.b16 %v678
          %v691 = vpack.c.b16 %v688, %v687
          %v692 = vpack.c.b16 %v690, %v689
          %v696 = vsel %vm658, %v637, 0
          %698 = vmatpush.bf16.msra.mxu0 0
          %699 = vmatpush.bf16.msra.mxu0 0
          %700 = vmatpush.bf16.msra.mxu0 0
          %701 = vmatpush.bf16.msra.mxu0 0
          %702 = vmatpush.bf16.msra.mxu0 0
          %703 = vmatpush.bf16.msra.mxu0 0
          %704 = vmatpush.bf16.msra.mxu0 %v692
          %705 = vmatpush.bf16.msra.mxu0 %v691
          %706 = vmatmul.bf16.gmra.mxu0 %v696
          %v707 = vpop.f32.mrf.mxu0
          %v708 = vadd.f32 %v681, %v707
          %v709 = vpop.f32.mrf.mxu0
          %710 = vdwg.mxu0
          %v711 = vpack.c.bf16 %v672, %v672
          %vm712 = vcmask 257024
          %713 = vst.msk [vmem:[#allocation2] sm:$0xf] %vm712, %v711
          %v714 = vpack.c.bf16 %v708, %v708
          %715 = vst.msk [vmem:[#allocation3] sm:$0xf] %vm712, %v714
        $region104: #{tpu_custom_call.1} parent=67 // pred_fallthru
          _
        %v716 = vld [vmem:[%s524] sm:$0xf]
        %v717 = vld [vmem:[%s554] sm:$0xf]
        %v718 = vunpack.c.l.bf16 %v717
        %v719 = vld [vmem:[#allocation13] sm:$0xf]
        %v720 = vld [vmem:[#allocation13 + $0x4] sm:$0xf]
        %v721 = vld [vmem:[#allocation13 + $0x8] sm:$0xf]
        %v722 = vld [vmem:[#allocation13 + $0xc] sm:$0xf]
        %v723 = vld [vmem:[%s5] sm:$0x1]
        %v725 = vperm.slane %v723, 0
        %v731 = vunpack.c.l.b16 %v719
        %v732 = vunpack.c.l.b16 %v720
        %v733 = vunpack.c.l.b16 %v721
        %v734 = vunpack.c.l.b16 %v722
        %v735 = vpack.c.b16 %v732, %v731
        %v736 = vpack.c.b16 %v734, %v733
        %vm739 = vcmask 261120
        %v741 = vsel %vm739, %v716, 0
        %743 = vmatpush.bf16.msra.mxu0 0
        %744 = vmatpush.bf16.msra.mxu0 0
        %745 = vmatpush.bf16.msra.mxu0 0
        %746 = vmatpush.bf16.msra.mxu0 0
        %747 = vmatpush.bf16.msra.mxu0 0
        %748 = vmatpush.bf16.msra.mxu0 0
        %749 = vmatpush.bf16.msra.mxu0 %v736
        %750 = vmatpush.bf16.msra.mxu0 %v735
        %751 = vmatmul.bf16.gmra.mxu0 %v741
        %v752 = vpop.f32.mrf.mxu0
        %v753 = vadd.f32 %v725, %v752
        %v754 = vpop.f32.mrf.mxu0
        %755 = vdwg.mxu0
        %v756 = vpack.c.bf16 %v753, %v753
        %v757 = vld [vmem:[#allocation2] sm:$0xf]
        %v758 = vld [vmem:[#allocation3] sm:$0xf]
        %vm759 = vcmask 64512
        %v761 = vsel %vm759, %v756, 0
        %v764 = vsel %vm759, %v757, 0
        %766 = vmatpush.bf16.xpose.msra.mxu0 0
        %767 = vmatpush.bf16.xpose.msra.mxu0 0
        %768 = vmatpush.bf16.xpose.msra.mxu0 0
        %769 = vmatpush.bf16.xpose.msra.mxu0 0
        %770 = vmatpush.bf16.xpose.msra.mxu0 0
        %771 = vmatpush.bf16.xpose.msra.mxu0 0
        %772 = vmatpush.bf16.xpose.msra.mxu0 0
        %773 = vmatpush.bf16.xpose.msra.mxu0 %v764
        %774 = vmatmul.bf16.gmra.mxu0 %v761
        %v775 = vpop.f32.mrf.mxu0
        %v776 = vadd.f32 %v718, %v775
        %v777 = vpop.f32.mrf.mxu0
        %778 = vdwg.mxu0
        %v779 = vsel %vm759, %v776, -inf
        %780 = vmax.xlane.f32.xlu0 %v779
        %v781 = vpop.xlane.xlu0 %780
        %v782 = vsub.f32 %v776, %v781
        %v783 = vmul.f32 %v782, 1.442695
        %v784 = vpow.pop %v783
        %v785 = vsel %vm759, %v784, 0.0
        %786 = vadd.xlane.f32.xlu0 %v785
        %v787 = vpop.xlane.xlu0 %786
        %v788 = vrcp.pop %v787
        %v789 = vmul.f32 %v784, %v788
        %v790 = vpack.c.bf16 %v789, %v789
        %v792 = vsel %vm759, %v790, 0
        %vm794 = vcmask 1043456
        %v796 = vsel %vm794, %v758, 0
        %798 = vmatpush.bf16.msra.mxu0 0
        %799 = vmatpush.bf16.msra.mxu0 0
        %800 = vmatpush.bf16.msra.mxu0 0
        %801 = vmatpush.bf16.msra.mxu0 0
        %802 = vmatpush.bf16.msra.mxu0 0
        %803 = vmatpush.bf16.msra.mxu0 0
        %804 = vmatpush.bf16.msra.mxu0 0
        %805 = vmatpush.bf16.msra.mxu0 %v796
        %806 = vmatmul.bf16.gmra.mxu0 %v792
        %v807 = vpop.f32.mrf.mxu0
        %v808 = vadd.f32 0.0, %v807
        %v809 = vpop.f32.mrf.mxu0
        %810 = vdwg.mxu0
        %v811 = vpack.c.bf16 %v808, %v808
        %vm812 = vcmask 60416
        %813 = vst.msk [vmem:[#allocation4] sm:$0xf] %vm812, %v811
        %v814 = vld [vmem:[#allocation2] sm:$0xf]
        %v815 = vld [vmem:[#allocation3] sm:$0xf]
        %v817 = vunpack.c.l.b16 %v756
        %v818 = vpack.c.b16 %v817, %v817
        %819 = vrot.lane.b32.xlu0 %v818, 120
        %v820 = vpop.permute.xlu0 %819
        %v822 = vunpack.c.l.b16 %v814
        %v823 = vpack.c.b16 %v822, %v822
        %824 = vrot.lane.b32.xlu0 %v823, 120
        %v825 = vpop.permute.xlu0 %824
        %v827 = vsel %vm759, %v820, 0
        %v830 = vsel %vm759, %v825, 0
        %832 = vmatpush.bf16.xpose.msra.mxu0 0
        %833 = vmatpush.bf16.xpose.msra.mxu0 0
        %834 = vmatpush.bf16.xpose.msra.mxu0 0
        %835 = vmatpush.bf16.xpose.msra.mxu0 0
        %836 = vmatpush.bf16.xpose.msra.mxu0 0
        %837 = vmatpush.bf16.xpose.msra.mxu0 0
        %838 = vmatpush.bf16.xpose.msra.mxu0 0
        %839 = vmatpush.bf16.xpose.msra.mxu0 %v830
        %840 = vmatmul.bf16.gmra.mxu0 %v827
        %v841 = vpop.f32.mrf.mxu0
        %v842 = vadd.f32 %v718, %v841
        %v843 = vpop.f32.mrf.mxu0
        %844 = vdwg.mxu0
        %v845 = vsel %vm759, %v842, -inf
        %846 = vmax.xlane.f32.xlu0 %v845
        %v847 = vpop.xlane.xlu0 %846
        %v848 = vsub.f32 %v842, %v847
        %v849 = vmul.f32 %v848, 1.442695
        %v850 = vpow.pop %v849
        %v851 = vsel %vm759, %v850, 0.0
        %852 = vadd.xlane.f32.xlu0 %v851
        %v853 = vpop.xlane.xlu0 %852
        %v854 = vrcp.pop %v853
        %v855 = vmul.f32 %v850, %v854
        %v856 = vpack.c.bf16 %v855, %v855
        %v858 = vunpack.c.l.b16 %v815
        %v859 = vpack.c.b16 %v858, %v858
        %860 = vrot.lane.b32.xlu0 %v859, 120
        %v861 = vpop.permute.xlu0 %860
        %v863 = vsel %vm759, %v856, 0
        %v866 = vsel %vm794, %v861, 0
        %868 = vmatpush.bf16.msra.mxu0 0
        %869 = vmatpush.bf16.msra.mxu0 0
        %870 = vmatpush.bf16.msra.mxu0 0
        %871 = vmatpush.bf16.msra.mxu0 0
        %872 = vmatpush.bf16.msra.mxu0 0
        %873 = vmatpush.bf16.msra.mxu0 0
        %874 = vmatpush.bf16.msra.mxu0 0
        %875 = vmatpush.bf16.msra.mxu0 %v866
        %876 = vmatmul.bf16.gmra.mxu0 %v863
        %v877 = vpop.f32.mrf.mxu0
        %v878 = vadd.f32 0.0, %v877
        %v879 = vpop.f32.mrf.mxu0
        %880 = vdwg.mxu0
        %v881 = vpack.c.bf16 %v878, %v878
        %883 = vrot.lane.b32.xlu0 %v881, 8
        %v884 = vpop.permute.xlu0 %883
        %vm886 = vcmask 126016
        %887 = vst.msk [vmem:[#allocation4] sm:$0xf] %vm886, %v884
        %v888 = vld [vmem:[#allocation2] sm:$0xf]
        %v889 = vld [vmem:[#allocation3] sm:$0xf]
        %890 = vrot.lane.b32.xlu0 %v818, 112
        %v891 = vpop.permute.xlu0 %890
        %v893 = vunpack.c.l.b16 %v888
        %v894 = vpack.c.b16 %v893, %v893
        %895 = vrot.lane.b32.xlu0 %v894, 112
        %v896 = vpop.permute.xlu0 %895
        %v898 = vsel %vm759, %v891, 0
        %v901 = vsel %vm759, %v896, 0
        %903 = vmatpush.bf16.xpose.msra.mxu0 0
        %904 = vmatpush.bf16.xpose.msra.mxu0 0
        %905 = vmatpush.bf16.xpose.msra.mxu0 0
        %906 = vmatpush.bf16.xpose.msra.mxu0 0
        %907 = vmatpush.bf16.xpose.msra.mxu0 0
        %908 = vmatpush.bf16.xpose.msra.mxu0 0
        %909 = vmatpush.bf16.xpose.msra.mxu0 0
        %910 = vmatpush.bf16.xpose.msra.mxu0 %v901
        %911 = vmatmul.bf16.gmra.mxu0 %v898
        %v912 = vpop.f32.mrf.mxu0
        %v913 = vadd.f32 %v718, %v912
        %v914 = vpop.f32.mrf.mxu0
        %915 = vdwg.mxu0
        %v916 = vsel %vm759, %v913, -inf
        %917 = vmax.xlane.f32.xlu0 %v916
        %v918 = vpop.xlane.xlu0 %917
        %v919 = vsub.f32 %v913, %v918
        %v920 = vmul.f32 %v919, 1.442695
        %v921 = vpow.pop %v920
        %v922 = vsel %vm759, %v921, 0.0
        %923 = vadd.xlane.f32.xlu0 %v922
        %v924 = vpop.xlane.xlu0 %923
        %v925 = vrcp.pop %v924
        %v926 = vmul.f32 %v921, %v925
        %v927 = vpack.c.bf16 %v926, %v926
        %v929 = vunpack.c.l.b16 %v889
        %v930 = vpack.c.b16 %v929, %v929
        %931 = vrot.lane.b32.xlu0 %v930, 112
        %v932 = vpop.permute.xlu0 %931
        %v934 = vsel %vm759, %v927, 0
        %v937 = vsel %vm794, %v932, 0
        %939 = vmatpush.bf16.msra.mxu0 0
        %940 = vmatpush.bf16.msra.mxu0 0
        %941 = vmatpush.bf16.msra.mxu0 0
        %942 = vmatpush.bf16.msra.mxu0 0
        %943 = vmatpush.bf16.msra.mxu0 0
        %944 = vmatpush.bf16.msra.mxu0 0
        %945 = vmatpush.bf16.msra.mxu0 0
        %946 = vmatpush.bf16.msra.mxu0 %v937
        %947 = vmatmul.bf16.gmra.mxu0 %v934
        %v948 = vpop.f32.mrf.mxu0
        %v949 = vadd.f32 0.0, %v948
        %v950 = vpop.f32.mrf.mxu0
        %951 = vdwg.mxu0
        %v952 = vpack.c.bf16 %v949, %v949
        %954 = vrot.lane.b32.xlu0 %v952, 16
        %v955 = vpop.permute.xlu0 %954
        %vm957 = vcmask 191616
        %958 = vst.msk [vmem:[#allocation4] sm:$0xf] %vm957, %v955
        %v959 = vld [vmem:[#allocation2] sm:$0xf]
        %v960 = vld [vmem:[#allocation3] sm:$0xf]
        %961 = vrot.lane.b32.xlu0 %v818, 104
        %v962 = vpop.permute.xlu0 %961
        %v964 = vunpack.c.l.b16 %v959
        %v965 = vpack.c.b16 %v964, %v964
        %966 = vrot.lane.b32.xlu0 %v965, 104
        %v967 = vpop.permute.xlu0 %966
        %v969 = vsel %vm759, %v962, 0
        %v972 = vsel %vm759, %v967, 0
        %974 = vmatpush.bf16.xpose.msra.mxu0 0
        %975 = vmatpush.bf16.xpose.msra.mxu0 0
        %976 = vmatpush.bf16.xpose.msra.mxu0 0
        %977 = vmatpush.bf16.xpose.msra.mxu0 0
        %978 = vmatpush.bf16.xpose.msra.mxu0 0
        %979 = vmatpush.bf16.xpose.msra.mxu0 0
        %980 = vmatpush.bf16.xpose.msra.mxu0 0
        %981 = vmatpush.bf16.xpose.msra.mxu0 %v972
        %982 = vmatmul.bf16.gmra.mxu0 %v969
        %v983 = vpop.f32.mrf.mxu0
        %v984 = vadd.f32 %v718, %v983
        %v985 = vpop.f32.mrf.mxu0
        %986 = vdwg.mxu0
        %v987 = vsel %vm759, %v984, -inf
        %988 = vmax.xlane.f32.xlu0 %v987
        %v989 = vpop.xlane.xlu0 %988
        %v990 = vsub.f32 %v984, %v989
        %v991 = vmul.f32 %v990, 1.442695
        %v992 = vpow.pop %v991
        %v993 = vsel %vm759, %v992, 0.0
        %994 = vadd.xlane.f32.xlu0 %v993
        %v995 = vpop.xlane.xlu0 %994
        %v996 = vrcp.pop %v995
        %v997 = vmul.f32 %v992, %v996
        %v998 = vpack.c.bf16 %v997, %v997
        %v1000 = vunpack.c.l.b16 %v960
        %v1001 = vpack.c.b16 %v1000, %v1000
        %1002 = vrot.lane.b32.xlu0 %v1001, 104
        %v1003 = vpop.permute.xlu0 %1002
        %v1005 = vsel %vm759, %v998, 0
        %v1008 = vsel %vm794, %v1003, 0
        %1010 = vmatpush.bf16.msra.mxu0 0
        %1011 = vmatpush.bf16.msra.mxu0 0
        %1012 = vmatpush.bf16.msra.mxu0 0
        %1013 = vmatpush.bf16.msra.mxu0 0
        %1014 = vmatpush.bf16.msra.mxu0 0
        %1015 = vmatpush.bf16.msra.mxu0 0
        %1016 = vmatpush.bf16.msra.mxu0 0
        %1017 = vmatpush.bf16.msra.mxu0 %v1008
        %1018 = vmatmul.bf16.gmra.mxu0 %v1005
        %v1019 = vpop.f32.mrf.mxu0
        %v1020 = vadd.f32 0.0, %v1019
        %v1021 = vpop.f32.mrf.mxu0
        %1022 = vdwg.mxu0
        %v1023 = vpack.c.bf16 %v1020, %v1020
        %1025 = vrot.lane.b32.xlu0 %v1023, 24
        %v1026 = vpop.permute.xlu0 %1025
        %vm1028 = vcmask 257216
        %1029 = vst.msk [vmem:[#allocation4] sm:$0xf] %vm1028, %v1026
        %v1030 = vld [vmem:[#allocation4] sm:$0xf]
        %v1031 = vld [vmem:[#allocation17] sm:$0xf]
        %v1032 = vld [vmem:[#allocation17 + $0x4] sm:$0xf]
        %v1033 = vld [vmem:[#allocation17 + $0x8] sm:$0xf]
        %v1034 = vld [vmem:[#allocation17 + $0xc] sm:$0xf]
        %v1035 = vld [vmem:[%s11] sm:$0x1]
        %v1037 = vperm.slane %v1035, 0
        %v1043 = vunpack.c.l.b16 %v1031
        %v1044 = vunpack.c.l.b16 %v1032
        %v1045 = vunpack.c.l.b16 %v1033
        %v1046 = vunpack.c.l.b16 %v1034
        %v1047 = vpack.c.b16 %v1044, %v1043
        %v1048 = vpack.c.b16 %v1046, %v1045
        %v1052 = vsel %vm739, %v1030, 0
        %1054 = vmatpush.bf16.msra.mxu0 0
        %1055 = vmatpush.bf16.msra.mxu0 0
        %1056 = vmatpush.bf16.msra.mxu0 0
        %1057 = vmatpush.bf16.msra.mxu0 0
        %1058 = vmatpush.bf16.msra.mxu0 0
        %1059 = vmatpush.bf16.msra.mxu0 0
        %1060 = vmatpush.bf16.msra.mxu0 %v1048
        %1061 = vmatpush.bf16.msra.mxu0 %v1047
        %1062 = vmatmul.bf16.gmra.mxu0 %v1052
        %v1063 = vpop.f32.mrf.mxu0
        %v1064 = vadd.f32 %v1037, %v1063
        %v1065 = vpop.f32.mrf.mxu0
        %1066 = vdwg.mxu0
        %1067 = vst.msk [vmem:[%s630] sm:$0xff] %vm739, %v1064
        %s1068 = sand.u32 %s335, 1
        %s1069 = scalar_lea.sflag [#allocation7], %s1068
        %s1070 = sand.u32 %s335, 1
        %s1071 = smul.addr %s1070, 8
        %s1072 = scalar_lea.vmem [#allocation19], %s1071
        // Predicated region
        $region105: #{tpu_custom_call.1} parent=67 // pred_check
          %p1073 = pneg %p345
        $region106: #{tpu_custom_call.1} parent=67 // pred_check_branch
          %1075 = sbr.rel (%p1073) target = $region108
        $region107: #{tpu_custom_call.1} parent=67 // pred_region
          %1077 = vsyncadd %s1069, 0
          %s1078 = sadd.s32 %s42, %s41
          %s1079 = smul.addr %s1078, 8
          %s1080 = scalar_lea.hbm %s12, %s1079
          %s1082 = sshll.u32 %s1072, 4
          %s1083 = int_to_ptr.vmem [resolvable:$true] %s1082
          %s1084 = sshll.u32 %s1080, 4
          %s1085 = int_to_ptr.hbm [resolvable:$true] %s1084
          %1087 = dma.vmem_to_hbm [thread:$0]  %s1083, 128, %s1085, %s1069
        $region108: #{tpu_custom_call.1} parent=67 // pred_fallthru
          _
      $region68: #{tpu_custom_call.1} parent=5 // pred_fallthru
        _
      %p1088 = scmp.le.s32.totalorder 2, %s32
      // Predicated region
      $region109: #{tpu_custom_call.1} parent=5 // pred_check
        %p1089 = pneg %p1088
      $region110: #{tpu_custom_call.1} parent=5 // pred_check_branch
        %1091 = sbr.rel (%p1089) target = $region112
      $region111: #{tpu_custom_call.1} parent=5 // pred_region
        %s1092 = ssub.s32 %s32, 2
        // Predicated region
        $region113: #{tpu_custom_call.1} parent=111 // pred_check
          %p1093 = pneg %p351
        $region114: #{tpu_custom_call.1} parent=111 // pred_check_branch
          %1095 = sbr.rel (%p1093) target = $region116
        $region115: #{tpu_custom_call.1} parent=111 // pred_region
          %s1096 = sand.u32 %s336, 1
          %s1097 = scalar_lea.sflag [#allocation7], %s1096
          %s1098 = sand.u32 %s336, 1
          %s1099 = smul.addr %s1098, 8
          %s1100 = scalar_lea.vmem [#allocation19], %s1099
          %1102 = dma.done %s1097, 128
        $region116: #{tpu_custom_call.1} parent=111 // pred_fallthru
          _
      $region112: #{tpu_custom_call.1} parent=5 // pred_fallthru
        _
    $region6: #{tpu_custom_call.1} parent=1 // loop_footer
      %s36 = sadd.s32 1, %s32
    $region7: #{tpu_custom_call.1} parent=1 // loop_footer_branch
      %31 = sbr.rel target = $region3
    $region8: #{tpu_custom_call.1} parent=1 // loop_exit
      _
    %1103 = vsyncpa [#allocation6], 1
    %s1104 = scalar_lea.sflag [#allocation6], 1
    %1105 = vsyncpa %s1104, 1
    %1106 = vsyncpa [#allocation9], 1
    %s1107 = scalar_lea.sflag [#allocation9], 1
    %1108 = vsyncpa %s1107, 1
    %1109 = vsyncpa [#allocation12], 1
    %s1110 = scalar_lea.sflag [#allocation12], 1
    %1111 = vsyncpa %s1110, 1
    %1112 = vsyncpa [#allocation15], 1
    %1113 = vsyncpa [#allocation18], 1
    %1114 = vsyncpa [#allocation7], 1
    %s1115 = scalar_lea.sflag [#allocation7], 1
    %1116 = vsyncpa %s1115, 1

</llo_original>
